<compile_context>
chip_gen: v5e
topology: v5e:2x2
jax: 0.10.0
libtpu: 0.0.40
codegen_flags: <defaults>
</compile_context>

<pallas_src>
import functools

import jax
import jax.numpy as jnp
from jax.experimental import pallas as pl
from jax.experimental.pallas import tpu as pltpu


def _pair(v):
    if isinstance(v, (tuple, list)):
        assert len(v) == 2
        return tuple(int(u) for u in v)
    return (int(v), int(v))


_STATIC_OH_LIMIT = 32  # above this, loop output rows with lax.fori_loop(unroll=4)


def _maxpool_kernel(x_ref, s_ref, o_ref, vpad_ref, *, H, W, kH, kW, sH, sW,
                    pH, pW, oH, oW, Wv, Wp, Bc, Rc, neg, highest):
    """x_ref: (Bc, H*W) flat rows, s_ref: (Wv, oW) 0/1 selection,
    o_ref: (Bc, oH, oW), vpad_ref: (Rc, Wp) horizontal-halo staging row."""
    dtype = x_ref.dtype
    sel = s_ref[...] if sW > 1 else None          # keep S resident in vregs
    prec = jax.lax.Precision.HIGHEST if highest else None

    if pW > 0:
        # Left/right padding borders of the staging row.  Re-written every grid
        # step, so this is safe under "parallel" grid sharding (megacore).
        vpad_ref[:, pl.ds(0, pW)] = jnp.full((Rc, pW), neg, dtype)
        vpad_ref[:, pl.ds(pW + W, pW)] = jnp.full((Rc, pW), neg, dtype)

    def one_output_row(c, oh, static):
        # ---- vertical max over the kH window rows (stride sH, offset -pH) ----
        r0 = oh * sH - pH
        vrow = None
        for kh in range(kH):
            r = r0 + kh
            if static:
                if r < 0 or r >= H:
                    continue                       # halo row: all padding, skip
                row = x_ref[pl.ds(c, Rc), pl.ds(r * W, W)]
            else:
                rcl = jnp.clip(r, 0, H - 1)
                start = pl.multiple_of(rcl * W, W)
                row = x_ref[pl.ds(c, Rc), pl.ds(start, W)]
                row = jnp.where(jnp.logical_and(r >= 0, r < H), row, neg)
            vrow = row if vrow is None else jnp.maximum(vrow, row)
        # pH < kH  =>  at least one real row contributed, vrow never equals neg.

        # ---- horizontal max over the kW window columns ----
        if pW > 0:
            vpad_ref[:, pl.ds(pW, W)] = vrow       # interior of the padded row
            hsrc = vpad_ref[...]                   # (Rc, Wp)
        else:
            hsrc = vrow                            # Wp == W
        acc = hsrc[:, 0:Wv]
        for kw in range(1, kW):
            acc = jnp.maximum(acc, hsrc[:, kw:kw + Wv])

        # ---- stride-sW lane subsample (exact one-hot selection) ----
        if sW > 1:
            pooled = jnp.dot(acc, sel, preferred_element_type=jnp.float32,
                             precision=prec)       # (Rc, oW)
        else:
            pooled = acc                           # Wv == oW
        # Lane-offset-0, full-width store into the 3-D output block.
        o_ref[pl.ds(c, Rc), pl.ds(oh, 1), :] = (
            pooled.astype(o_ref.dtype)[:, None, :])

    # Static Rc-row chunking keeps the live working set small regardless of Bc.
    for c in range(0, Bc, Rc):
        if oH <= _STATIC_OH_LIMIT:
            for oh in range(oH):
                one_output_row(c, oh, static=True)
        else:
            def body(oh, carry):
                one_output_row(c, oh, static=False)
                return carry
            jax.lax.fori_loop(0, oH, body, 0, unroll=4)


def maxpool2d(x, kernel_size, stride=None, padding=1, dilation=1):
    """Forward of the reference MaxPool2d module (NCHW in / NCHW out).

    `dilation` is accepted and ignored, exactly like the reference forward
    (the module stores it but never uses it)."""
    if stride is None:
        stride = kernel_size
    kH, kW = _pair(kernel_size)
    sH, sW = _pair(stride)
    pH, pW = _pair(padding)
    del dilation

    N, C, H, W = x.shape
    dtype = x.dtype
    assert jnp.issubdtype(dtype, jnp.floating), "maxpool2d expects float input"
    # Needed so the finite -inf stand-in can never win a max that reaches the
    # output (PyTorch enforces the same constraint on MaxPool padding).
    assert pH < kH and pW < kW, "padding must be smaller than kernel_size"

    oH = (H + 2 * pH - kH) // sH + 1
    oW = (W + 2 * pW - kW) // sW + 1
    assert oH > 0 and oW > 0
    Wp = W + 2 * pW
    Wv = (oW - 1) * sW + 1                  # lane span feeding the subsample
    NC = N * C
    isz = jnp.dtype(dtype).itemsize
    neg = float(jnp.finfo(dtype).min)       # finite "-inf" stand-in

    # ---- Bc sizing: biggest sublane-aligned (N*C)-row block whose
    #      double-buffered in/out blocks fit a per-generation-safe VMEM budget
    #      (v7x only has 64 MiB per TensorCore). ----
    pack = 8 * (4 // isz)                   # 8 rows (f32), 16 (bf16), 32 (int8)
    budget = 40 * 1024 * 1024
    per_row = 2 * (H * W + oH * oW) * isz   # double-buffered in + out bytes/row
    bc = max(pack, budget // max(per_row, 1))
    bc = min(bc, 2048)                      # diminishing returns past ~2k rows
    if NC > 2 * pack:                       # keep >= 2 grid steps so both v7x
        bc = min(bc, -(-NC // 2))           # TensorCores get work
    bc = max(pack, (bc // pack) * pack)
    bc = min(bc, -(-NC // pack) * pack)     # never bigger than the problem
    # In-kernel row chunk: bounds the live vreg working set (~<=32 KiB/array).
    rc = (32 * 1024) // max(Wp * isz, 1)
    rc = max(pack, min(32, (rc // pack) * pack))
    rc = min(rc, bc)
    bc = max(rc, (bc // rc) * rc)           # chunk count is exact
    Bc, Rc = bc, rc

    # 0/1 selection matrix for the stride-sW lane subsample (VMEM resident).
    j = jnp.arange(Wv, dtype=jnp.int32)[:, None]
    o = jnp.arange(oW, dtype=jnp.int32)[None, :]
    S = (j == o * sW).astype(dtype)         # (Wv, oW)

    x2 = x.reshape(NC, H * W)               # free reshape: no transpose, no pad

    vmem_need = (2 * Bc * (H * W + oH * oW) + Rc * Wp + Wv * oW) * isz
    vmem_limit = int(min(max(vmem_need + (4 << 20), 32 << 20), 48 << 20))

    kernel = functools.partial(
        _maxpool_kernel, H=H, W=W, kH=kH, kW=kW, sH=sH, sW=sW, pH=pH, pW=pW,
        oH=oH, oW=oW, Wv=Wv, Wp=Wp, Bc=Bc, Rc=Rc, neg=neg,
        highest=(jnp.dtype(dtype) == jnp.dtype(jnp.float32)))

    y = pl.pallas_call(
        kernel,
        out_shape=jax.ShapeDtypeStruct((NC, oH, oW), dtype),
        grid=(pl.cdiv(NC, Bc),),
        in_specs=[
            pl.BlockSpec((Bc, H * W), lambda i: (i, 0)),   # flat lane-dense rows
            pl.BlockSpec((Wv, oW), lambda i: (0, 0)),      # selection matrix
        ],
        out_specs=pl.BlockSpec((Bc, oH, oW), lambda i: (i, 0, 0)),
        scratch_shapes=[pltpu.VMEM((Rc, Wp), dtype)],      # padded-row staging
        compiler_params=pltpu.CompilerParams(
            dimension_semantics=("parallel",),
            vmem_limit_bytes=vmem_limit),
    )(x2, S)

    return y.reshape(N, C, oH, oW)


if __name__ == "__main__":
    key = jax.random.PRNGKey(0)
    N, C, H, W = 2, 4, 16, 16
    x = jax.random.normal(key, (N, C, H, W), dtype=jnp.float32)

    kernel_size, stride, padding = 3, 2, 1   # classic ResNet-style maxpool

    y = maxpool2d(x, kernel_size, stride=stride, padding=padding)
    y = jax.block_until_ready(y)

    # Pure-JAX reference matching the PyTorch module: pad with -inf, window amax.
    y_ref = jax.lax.reduce_window(
        x, -jnp.inf, jax.lax.max,
        window_dimensions=(1, 1, kernel_size, kernel_size),
        window_strides=(1, 1, stride, stride),
        padding=((0, 0), (0, 0), (padding, padding), (padding, padding)))

    assert y.shape == y_ref.shape, (y.shape, y_ref.shape)
    assert jnp.allclose(y, y_ref, atol=1e-5, rtol=1e-5), "mismatch vs reference"
    print("KERNEL_OK")
</pallas_src>

<mosaic_0001>
module attributes {stable_mosaic.version = 11 : i64} {
  func.func @_maxpool_kernel(%arg0: i32, %arg1: memref<8x256xf32, #tpu.memory_space<vmem>>, %arg2: memref<15x8xf32, #tpu.memory_space<vmem>>, %arg3: memref<8x8x8xf32, #tpu.memory_space<vmem>>, %arg4: memref<8x18xf32, #tpu.memory_space<vmem>>) attributes {dimension_semantics = [#tpu.dimension_semantics<parallel>], iteration_bounds = array<i64: 1>, scalar_prefetch = 0 : i64, scratch_operands = 1 : i64, tpu.core_type = #tpu.core_type<tc>, window_params = [{transform_indices = @transform_0, window_bounds = array<i64: 8, 256>}, {pipeline_mode = #tpu.pipeline_mode<synchronous>, transform_indices = @transform_1, window_bounds = array<i64: 15, 8>}, {transform_indices = @transform_2, window_bounds = array<i64: 8, 8, 8>}]} {
    %c0 = arith.constant 0 : index
    %c0_0 = arith.constant 0 : index
    %0 = vector.load %arg2[%c0, %c0_0] : memref<15x8xf32, #tpu.memory_space<vmem>>, vector<15x8xf32>
    %cst = arith.constant -3.40282347E+38 : f32
    %1 = vector.broadcast %cst : f32 to vector<8x1xf32>
    %c0_1 = arith.constant 0 : index
    %c0_2 = arith.constant 0 : index
    %2 = vector.load %arg4[%c0_1, %c0_2] : memref<8x18xf32, #tpu.memory_space<vmem>>, vector<8x1xf32>
    tpu.vector_store %arg4[%c0_1, %c0_2], %1 {strides = array<i32>} : memref<8x18xf32, #tpu.memory_space<vmem>>, vector<8x1xf32>,
    %cst_3 = arith.constant -3.40282347E+38 : f32
    %3 = vector.broadcast %cst_3 : f32 to vector<8x1xf32>
    %c0_4 = arith.constant 0 : index
    %c17 = arith.constant 17 : index
    %4 = vector.load %arg4[%c0_4, %c17] : memref<8x18xf32, #tpu.memory_space<vmem>>, vector<8x1xf32>
    tpu.vector_store %arg4[%c0_4, %c17], %3 {strides = array<i32>} : memref<8x18xf32, #tpu.memory_space<vmem>>, vector<8x1xf32>,
    %c0_5 = arith.constant 0 : index
    %c0_6 = arith.constant 0 : index
    %5 = vector.load %arg1[%c0_5, %c0_6] : memref<8x256xf32, #tpu.memory_space<vmem>>, vector<8x16xf32>
    %c0_7 = arith.constant 0 : index
    %c16 = arith.constant 16 : index
    %6 = vector.load %arg1[%c0_7, %c16] : memref<8x256xf32, #tpu.memory_space<vmem>>, vector<8x16xf32>
    %7 = arith.maximumf %5, %6 : vector<8x16xf32>
    %c0_8 = arith.constant 0 : index
    %c1 = arith.constant 1 : index
    %8 = vector.load %arg4[%c0_8, %c1] : memref<8x18xf32, #tpu.memory_space<vmem>>, vector<8x16xf32>
    tpu.vector_store %arg4[%c0_8, %c1], %7 {strides = array<i32>} : memref<8x18xf32, #tpu.memory_space<vmem>>, vector<8x16xf32>,
    %c0_9 = arith.constant 0 : index
    %c0_10 = arith.constant 0 : index
    %9 = vector.load %arg4[%c0_9, %c0_10] : memref<8x18xf32, #tpu.memory_space<vmem>>, vector<8x18xf32>
    %10 = vector.extract_strided_slice %9 {offsets = [0, 0], sizes = [8, 15], strides = [1, 1]} : vector<8x18xf32> to vector<8x15xf32>
    %11 = vector.extract_strided_slice %9 {offsets = [0, 1], sizes = [8, 15], strides = [1, 1]} : vector<8x18xf32> to vector<8x15xf32>
    %12 = arith.maximumf %10, %11 : vector<8x15xf32>
    %13 = vector.extract_strided_slice %9 {offsets = [0, 2], sizes = [8, 15], strides = [1, 1]} : vector<8x18xf32> to vector<8x15xf32>
    %14 = arith.maximumf %12, %13 : vector<8x15xf32>
    %cst_11 = arith.constant dense<0.000000e+00> : vector<8x8xf32>
    %15 = tpu.matmul %14, %0, %cst_11 {dimension_numbers = #tpu.dot_dimension_numbers<[1], [0], [0], [1], [0, 0, 1, 1], [], []>, precision = #tpu.contract_precision<fp32>} : vector<8x15xf32>, vector<15x8xf32>, vector<8x8xf32> -> vector<8x8xf32>
    %16 = vector.shape_cast %15 : vector<8x8xf32> to vector<8x1x8xf32>
    %c0_12 = arith.constant 0 : index
    %c0_13 = arith.constant 0 : index
    %c0_14 = arith.constant 0 : index
    %17 = vector.load %arg3[%c0_12, %c0_13, %c0_14] : memref<8x8x8xf32, #tpu.memory_space<vmem>>, vector<8x1x8xf32>
    tpu.vector_store %arg3[%c0_12, %c0_13, %c0_14], %16 {strides = array<i32>} : memref<8x8x8xf32, #tpu.memory_space<vmem>>, vector<8x1x8xf32>,
    %c0_15 = arith.constant 0 : index
    %c16_16 = arith.constant 16 : index
    %18 = vector.load %arg1[%c0_15, %c16_16] : memref<8x256xf32, #tpu.memory_space<vmem>>, vector<8x16xf32>
    %c0_17 = arith.constant 0 : index
    %c32 = arith.constant 32 : index
    %19 = vector.load %arg1[%c0_17, %c32] : memref<8x256xf32, #tpu.memory_space<vmem>>, vector<8x16xf32>
    %20 = arith.maximumf %18, %19 : vector<8x16xf32>
    %c0_18 = arith.constant 0 : index
    %c48 = arith.constant 48 : index
    %21 = vector.load %arg1[%c0_18, %c48] : memref<8x256xf32, #tpu.memory_space<vmem>>, vector<8x16xf32>
    %22 = arith.maximumf %20, %21 : vector<8x16xf32>
    %c0_19 = arith.constant 0 : index
    %c1_20 = arith.constant 1 : index
    %23 = vector.load %arg4[%c0_19, %c1_20] : memref<8x18xf32, #tpu.memory_space<vmem>>, vector<8x16xf32>
    tpu.vector_store %arg4[%c0_19, %c1_20], %22 {strides = array<i32>} : memref<8x18xf32, #tpu.memory_space<vmem>>, vector<8x16xf32>,
    %c0_21 = arith.constant 0 : index
    %c0_22 = arith.constant 0 : index
    %24 = vector.load %arg4[%c0_21, %c0_22] : memref<8x18xf32, #tpu.memory_space<vmem>>, vector<8x18xf32>
    %25 = vector.extract_strided_slice %24 {offsets = [0, 0], sizes = [8, 15], strides = [1, 1]} : vector<8x18xf32> to vector<8x15xf32>
    %26 = vector.extract_strided_slice %24 {offsets = [0, 1], sizes = [8, 15], strides = [1, 1]} : vector<8x18xf32> to vector<8x15xf32>
    %27 = arith.maximumf %25, %26 : vector<8x15xf32>
    %28 = vector.extract_strided_slice %24 {offsets = [0, 2], sizes = [8, 15], strides = [1, 1]} : vector<8x18xf32> to vector<8x15xf32>
    %29 = arith.maximumf %27, %28 : vector<8x15xf32>
    %cst_23 = arith.constant dense<0.000000e+00> : vector<8x8xf32>
    %30 = tpu.matmul %29, %0, %cst_23 {dimension_numbers = #tpu.dot_dimension_numbers<[1], [0], [0], [1], [0, 0, 1, 1], [], []>, precision = #tpu.contract_precision<fp32>} : vector<8x15xf32>, vector<15x8xf32>, vector<8x8xf32> -> vector<8x8xf32>
    %31 = vector.shape_cast %30 : vector<8x8xf32> to vector<8x1x8xf32>
    %c0_24 = arith.constant 0 : index
    %c1_25 = arith.constant 1 : index
    %c0_26 = arith.constant 0 : index
    %32 = vector.load %arg3[%c0_24, %c1_25, %c0_26] : memref<8x8x8xf32, #tpu.memory_space<vmem>>, vector<8x1x8xf32>
    tpu.vector_store %arg3[%c0_24, %c1_25, %c0_26], %31 {strides = array<i32>} : memref<8x8x8xf32, #tpu.memory_space<vmem>>, vector<8x1x8xf32>,
    %c0_27 = arith.constant 0 : index
    %c48_28 = arith.constant 48 : index
    %33 = vector.load %arg1[%c0_27, %c48_28] : memref<8x256xf32, #tpu.memory_space<vmem>>, vector<8x16xf32>
    %c0_29 = arith.constant 0 : index
    %c64 = arith.constant 64 : index
    %34 = vector.load %arg1[%c0_29, %c64] : memref<8x256xf32, #tpu.memory_space<vmem>>, vector<8x16xf32>
    %35 = arith.maximumf %33, %34 : vector<8x16xf32>
    %c0_30 = arith.constant 0 : index
    %c80 = arith.constant 80 : index
    %36 = vector.load %arg1[%c0_30, %c80] : memref<8x256xf32, #tpu.memory_space<vmem>>, vector<8x16xf32>
    %37 = arith.maximumf %35, %36 : vector<8x16xf32>
    %c0_31 = arith.constant 0 : index
    %c1_32 = arith.constant 1 : index
    %38 = vector.load %arg4[%c0_31, %c1_32] : memref<8x18xf32, #tpu.memory_space<vmem>>, vector<8x16xf32>
    tpu.vector_store %arg4[%c0_31, %c1_32], %37 {strides = array<i32>} : memref<8x18xf32, #tpu.memory_space<vmem>>, vector<8x16xf32>,
    %c0_33 = arith.constant 0 : index
    %c0_34 = arith.constant 0 : index
    %39 = vector.load %arg4[%c0_33, %c0_34] : memref<8x18xf32, #tpu.memory_space<vmem>>, vector<8x18xf32>
    %40 = vector.extract_strided_slice %39 {offsets = [0, 0], sizes = [8, 15], strides = [1, 1]} : vector<8x18xf32> to vector<8x15xf32>
    %41 = vector.extract_strided_slice %39 {offsets = [0, 1], sizes = [8, 15], strides = [1, 1]} : vector<8x18xf32> to vector<8x15xf32>
    %42 = arith.maximumf %40, %41 : vector<8x15xf32>
    %43 = vector.extract_strided_slice %39 {offsets = [0, 2], sizes = [8, 15], strides = [1, 1]} : vector<8x18xf32> to vector<8x15xf32>
    %44 = arith.maximumf %42, %43 : vector<8x15xf32>
    %cst_35 = arith.constant dense<0.000000e+00> : vector<8x8xf32>
    %45 = tpu.matmul %44, %0, %cst_35 {dimension_numbers = #tpu.dot_dimension_numbers<[1], [0], [0], [1], [0, 0, 1, 1], [], []>, precision = #tpu.contract_precision<fp32>} : vector<8x15xf32>, vector<15x8xf32>, vector<8x8xf32> -> vector<8x8xf32>
    %46 = vector.shape_cast %45 : vector<8x8xf32> to vector<8x1x8xf32>
    %c0_36 = arith.constant 0 : index
    %c2 = arith.constant 2 : index
    %c0_37 = arith.constant 0 : index
    %47 = vector.load %arg3[%c0_36, %c2, %c0_37] : memref<8x8x8xf32, #tpu.memory_space<vmem>>, vector<8x1x8xf32>
    tpu.vector_store %arg3[%c0_36, %c2, %c0_37], %46 {strides = array<i32>} : memref<8x8x8xf32, #tpu.memory_space<vmem>>, vector<8x1x8xf32>,
    %c0_38 = arith.constant 0 : index
    %c80_39 = arith.constant 80 : index
    %48 = vector.load %arg1[%c0_38, %c80_39] : memref<8x256xf32, #tpu.memory_space<vmem>>, vector<8x16xf32>
    %c0_40 = arith.constant 0 : index
    %c96 = arith.constant 96 : index
    %49 = vector.load %arg1[%c0_40, %c96] : memref<8x256xf32, #tpu.memory_space<vmem>>, vector<8x16xf32>
    %50 = arith.maximumf %48, %49 : vector<8x16xf32>
    %c0_41 = arith.constant 0 : index
    %c112 = arith.constant 112 : index
    %51 = vector.load %arg1[%c0_41, %c112] : memref<8x256xf32, #tpu.memory_space<vmem>>, vector<8x16xf32>
    %52 = arith.maximumf %50, %51 : vector<8x16xf32>
    %c0_42 = arith.constant 0 : index
    %c1_43 = arith.constant 1 : index
    %53 = vector.load %arg4[%c0_42, %c1_43] : memref<8x18xf32, #tpu.memory_space<vmem>>, vector<8x16xf32>
    tpu.vector_store %arg4[%c0_42, %c1_43], %52 {strides = array<i32>} : memref<8x18xf32, #tpu.memory_space<vmem>>, vector<8x16xf32>,
    %c0_44 = arith.constant 0 : index
    %c0_45 = arith.constant 0 : index
    %54 = vector.load %arg4[%c0_44, %c0_45] : memref<8x18xf32, #tpu.memory_space<vmem>>, vector<8x18xf32>
    %55 = vector.extract_strided_slice %54 {offsets = [0, 0], sizes = [8, 15], strides = [1, 1]} : vector<8x18xf32> to vector<8x15xf32>
    %56 = vector.extract_strided_slice %54 {offsets = [0, 1], sizes = [8, 15], strides = [1, 1]} : vector<8x18xf32> to vector<8x15xf32>
    %57 = arith.maximumf %55, %56 : vector<8x15xf32>
    %58 = vector.extract_strided_slice %54 {offsets = [0, 2], sizes = [8, 15], strides = [1, 1]} : vector<8x18xf32> to vector<8x15xf32>
    %59 = arith.maximumf %57, %58 : vector<8x15xf32>
    %cst_46 = arith.constant dense<0.000000e+00> : vector<8x8xf32>
    %60 = tpu.matmul %59, %0, %cst_46 {dimension_numbers = #tpu.dot_dimension_numbers<[1], [0], [0], [1], [0, 0, 1, 1], [], []>, precision = #tpu.contract_precision<fp32>} : vector<8x15xf32>, vector<15x8xf32>, vector<8x8xf32> -> vector<8x8xf32>
    %61 = vector.shape_cast %60 : vector<8x8xf32> to vector<8x1x8xf32>
    %c0_47 = arith.constant 0 : index
    %c3 = arith.constant 3 : index
    %c0_48 = arith.constant 0 : index
    %62 = vector.load %arg3[%c0_47, %c3, %c0_48] : memref<8x8x8xf32, #tpu.memory_space<vmem>>, vector<8x1x8xf32>
    tpu.vector_store %arg3[%c0_47, %c3, %c0_48], %61 {strides = array<i32>} : memref<8x8x8xf32, #tpu.memory_space<vmem>>, vector<8x1x8xf32>,
    %c0_49 = arith.constant 0 : index
    %c112_50 = arith.constant 112 : index
    %63 = vector.load %arg1[%c0_49, %c112_50] : memref<8x256xf32, #tpu.memory_space<vmem>>, vector<8x16xf32>
    %c0_51 = arith.constant 0 : index
    %c128 = arith.constant 128 : index
    %64 = vector.load %arg1[%c0_51, %c128] : memref<8x256xf32, #tpu.memory_space<vmem>>, vector<8x16xf32>
    %65 = arith.maximumf %63, %64 : vector<8x16xf32>
    %c0_52 = arith.constant 0 : index
    %c144 = arith.constant 144 : index
    %66 = vector.load %arg1[%c0_52, %c144] : memref<8x256xf32, #tpu.memory_space<vmem>>, vector<8x16xf32>
    %67 = arith.maximumf %65, %66 : vector<8x16xf32>
    %c0_53 = arith.constant 0 : index
    %c1_54 = arith.constant 1 : index
    %68 = vector.load %arg4[%c0_53, %c1_54] : memref<8x18xf32, #tpu.memory_space<vmem>>, vector<8x16xf32>
    tpu.vector_store %arg4[%c0_53, %c1_54], %67 {strides = array<i32>} : memref<8x18xf32, #tpu.memory_space<vmem>>, vector<8x16xf32>,
    %c0_55 = arith.constant 0 : index
    %c0_56 = arith.constant 0 : index
    %69 = vector.load %arg4[%c0_55, %c0_56] : memref<8x18xf32, #tpu.memory_space<vmem>>, vector<8x18xf32>
    %70 = vector.extract_strided_slice %69 {offsets = [0, 0], sizes = [8, 15], strides = [1, 1]} : vector<8x18xf32> to vector<8x15xf32>
    %71 = vector.extract_strided_slice %69 {offsets = [0, 1], sizes = [8, 15], strides = [1, 1]} : vector<8x18xf32> to vector<8x15xf32>
    %72 = arith.maximumf %70, %71 : vector<8x15xf32>
    %73 = vector.extract_strided_slice %69 {offsets = [0, 2], sizes = [8, 15], strides = [1, 1]} : vector<8x18xf32> to vector<8x15xf32>
    %74 = arith.maximumf %72, %73 : vector<8x15xf32>
    %cst_57 = arith.constant dense<0.000000e+00> : vector<8x8xf32>
    %75 = tpu.matmul %74, %0, %cst_57 {dimension_numbers = #tpu.dot_dimension_numbers<[1], [0], [0], [1], [0, 0, 1, 1], [], []>, precision = #tpu.contract_precision<fp32>} : vector<8x15xf32>, vector<15x8xf32>, vector<8x8xf32> -> vector<8x8xf32>
    %76 = vector.shape_cast %75 : vector<8x8xf32> to vector<8x1x8xf32>
    %c0_58 = arith.constant 0 : index
    %c4 = arith.constant 4 : index
    %c0_59 = arith.constant 0 : index
    %77 = vector.load %arg3[%c0_58, %c4, %c0_59] : memref<8x8x8xf32, #tpu.memory_space<vmem>>, vector<8x1x8xf32>
    tpu.vector_store %arg3[%c0_58, %c4, %c0_59], %76 {strides = array<i32>} : memref<8x8x8xf32, #tpu.memory_space<vmem>>, vector<8x1x8xf32>,
    %c0_60 = arith.constant 0 : index
    %c144_61 = arith.constant 144 : index
    %78 = vector.load %arg1[%c0_60, %c144_61] : memref<8x256xf32, #tpu.memory_space<vmem>>, vector<8x16xf32>
    %c0_62 = arith.constant 0 : index
    %c160 = arith.constant 160 : index
    %79 = vector.load %arg1[%c0_62, %c160] : memref<8x256xf32, #tpu.memory_space<vmem>>, vector<8x16xf32>
    %80 = arith.maximumf %78, %79 : vector<8x16xf32>
    %c0_63 = arith.constant 0 : index
    %c176 = arith.constant 176 : index
    %81 = vector.load %arg1[%c0_63, %c176] : memref<8x256xf32, #tpu.memory_space<vmem>>, vector<8x16xf32>
    %82 = arith.maximumf %80, %81 : vector<8x16xf32>
    %c0_64 = arith.constant 0 : index
    %c1_65 = arith.constant 1 : index
    %83 = vector.load %arg4[%c0_64, %c1_65] : memref<8x18xf32, #tpu.memory_space<vmem>>, vector<8x16xf32>
    tpu.vector_store %arg4[%c0_64, %c1_65], %82 {strides = array<i32>} : memref<8x18xf32, #tpu.memory_space<vmem>>, vector<8x16xf32>,
    %c0_66 = arith.constant 0 : index
    %c0_67 = arith.constant 0 : index
    %84 = vector.load %arg4[%c0_66, %c0_67] : memref<8x18xf32, #tpu.memory_space<vmem>>, vector<8x18xf32>
    %85 = vector.extract_strided_slice %84 {offsets = [0, 0], sizes = [8, 15], strides = [1, 1]} : vector<8x18xf32> to vector<8x15xf32>
    %86 = vector.extract_strided_slice %84 {offsets = [0, 1], sizes = [8, 15], strides = [1, 1]} : vector<8x18xf32> to vector<8x15xf32>
    %87 = arith.maximumf %85, %86 : vector<8x15xf32>
    %88 = vector.extract_strided_slice %84 {offsets = [0, 2], sizes = [8, 15], strides = [1, 1]} : vector<8x18xf32> to vector<8x15xf32>
    %89 = arith.maximumf %87, %88 : vector<8x15xf32>
    %cst_68 = arith.constant dense<0.000000e+00> : vector<8x8xf32>
    %90 = tpu.matmul %89, %0, %cst_68 {dimension_numbers = #tpu.dot_dimension_numbers<[1], [0], [0], [1], [0, 0, 1, 1], [], []>, precision = #tpu.contract_precision<fp32>} : vector<8x15xf32>, vector<15x8xf32>, vector<8x8xf32> -> vector<8x8xf32>
    %91 = vector.shape_cast %90 : vector<8x8xf32> to vector<8x1x8xf32>
    %c0_69 = arith.constant 0 : index
    %c5 = arith.constant 5 : index
    %c0_70 = arith.constant 0 : index
    %92 = vector.load %arg3[%c0_69, %c5, %c0_70] : memref<8x8x8xf32, #tpu.memory_space<vmem>>, vector<8x1x8xf32>
    tpu.vector_store %arg3[%c0_69, %c5, %c0_70], %91 {strides = array<i32>} : memref<8x8x8xf32, #tpu.memory_space<vmem>>, vector<8x1x8xf32>,
    %c0_71 = arith.constant 0 : index
    %c176_72 = arith.constant 176 : index
    %93 = vector.load %arg1[%c0_71, %c176_72] : memref<8x256xf32, #tpu.memory_space<vmem>>, vector<8x16xf32>
    %c0_73 = arith.constant 0 : index
    %c192 = arith.constant 192 : index
    %94 = vector.load %arg1[%c0_73, %c192] : memref<8x256xf32, #tpu.memory_space<vmem>>, vector<8x16xf32>
    %95 = arith.maximumf %93, %94 : vector<8x16xf32>
    %c0_74 = arith.constant 0 : index
    %c208 = arith.constant 208 : index
    %96 = vector.load %arg1[%c0_74, %c208] : memref<8x256xf32, #tpu.memory_space<vmem>>, vector<8x16xf32>
    %97 = arith.maximumf %95, %96 : vector<8x16xf32>
    %c0_75 = arith.constant 0 : index
    %c1_76 = arith.constant 1 : index
    %98 = vector.load %arg4[%c0_75, %c1_76] : memref<8x18xf32, #tpu.memory_space<vmem>>, vector<8x16xf32>
    tpu.vector_store %arg4[%c0_75, %c1_76], %97 {strides = array<i32>} : memref<8x18xf32, #tpu.memory_space<vmem>>, vector<8x16xf32>,
    %c0_77 = arith.constant 0 : index
    %c0_78 = arith.constant 0 : index
    %99 = vector.load %arg4[%c0_77, %c0_78] : memref<8x18xf32, #tpu.memory_space<vmem>>, vector<8x18xf32>
    %100 = vector.extract_strided_slice %99 {offsets = [0, 0], sizes = [8, 15], strides = [1, 1]} : vector<8x18xf32> to vector<8x15xf32>
    %101 = vector.extract_strided_slice %99 {offsets = [0, 1], sizes = [8, 15], strides = [1, 1]} : vector<8x18xf32> to vector<8x15xf32>
    %102 = arith.maximumf %100, %101 : vector<8x15xf32>
    %103 = vector.extract_strided_slice %99 {offsets = [0, 2], sizes = [8, 15], strides = [1, 1]} : vector<8x18xf32> to vector<8x15xf32>
    %104 = arith.maximumf %102, %103 : vector<8x15xf32>
    %cst_79 = arith.constant dense<0.000000e+00> : vector<8x8xf32>
    %105 = tpu.matmul %104, %0, %cst_79 {dimension_numbers = #tpu.dot_dimension_numbers<[1], [0], [0], [1], [0, 0, 1, 1], [], []>, precision = #tpu.contract_precision<fp32>} : vector<8x15xf32>, vector<15x8xf32>, vector<8x8xf32> -> vector<8x8xf32>
    %106 = vector.shape_cast %105 : vector<8x8xf32> to vector<8x1x8xf32>
    %c0_80 = arith.constant 0 : index
    %c6 = arith.constant 6 : index
    %c0_81 = arith.constant 0 : index
    %107 = vector.load %arg3[%c0_80, %c6, %c0_81] : memref<8x8x8xf32, #tpu.memory_space<vmem>>, vector<8x1x8xf32>
    tpu.vector_store %arg3[%c0_80, %c6, %c0_81], %106 {strides = array<i32>} : memref<8x8x8xf32, #tpu.memory_space<vmem>>, vector<8x1x8xf32>,
    %c0_82 = arith.constant 0 : index
    %c208_83 = arith.constant 208 : index
    %108 = vector.load %arg1[%c0_82, %c208_83] : memref<8x256xf32, #tpu.memory_space<vmem>>, vector<8x16xf32>
    %c0_84 = arith.constant 0 : index
    %c224 = arith.constant 224 : index
    %109 = vector.load %arg1[%c0_84, %c224] : memref<8x256xf32, #tpu.memory_space<vmem>>, vector<8x16xf32>
    %110 = arith.maximumf %108, %109 : vector<8x16xf32>
    %c0_85 = arith.constant 0 : index
    %c240 = arith.constant 240 : index
    %111 = vector.load %arg1[%c0_85, %c240] : memref<8x256xf32, #tpu.memory_space<vmem>>, vector<8x16xf32>
    %112 = arith.maximumf %110, %111 : vector<8x16xf32>
    %c0_86 = arith.constant 0 : index
    %c1_87 = arith.constant 1 : index
    %113 = vector.load %arg4[%c0_86, %c1_87] : memref<8x18xf32, #tpu.memory_space<vmem>>, vector<8x16xf32>
    tpu.vector_store %arg4[%c0_86, %c1_87], %112 {strides = array<i32>} : memref<8x18xf32, #tpu.memory_space<vmem>>, vector<8x16xf32>,
    %c0_88 = arith.constant 0 : index
    %c0_89 = arith.constant 0 : index
    %114 = vector.load %arg4[%c0_88, %c0_89] : memref<8x18xf32, #tpu.memory_space<vmem>>, vector<8x18xf32>
    %115 = vector.extract_strided_slice %114 {offsets = [0, 0], sizes = [8, 15], strides = [1, 1]} : vector<8x18xf32> to vector<8x15xf32>
    %116 = vector.extract_strided_slice %114 {offsets = [0, 1], sizes = [8, 15], strides = [1, 1]} : vector<8x18xf32> to vector<8x15xf32>
    %117 = arith.maximumf %115, %116 : vector<8x15xf32>
    %118 = vector.extract_strided_slice %114 {offsets = [0, 2], sizes = [8, 15], strides = [1, 1]} : vector<8x18xf32> to vector<8x15xf32>
    %119 = arith.maximumf %117, %118 : vector<8x15xf32>
    %cst_90 = arith.constant dense<0.000000e+00> : vector<8x8xf32>
    %120 = tpu.matmul %119, %0, %cst_90 {dimension_numbers = #tpu.dot_dimension_numbers<[1], [0], [0], [1], [0, 0, 1, 1], [], []>, precision = #tpu.contract_precision<fp32>} : vector<8x15xf32>, vector<15x8xf32>, vector<8x8xf32> -> vector<8x8xf32>
    %121 = vector.shape_cast %120 : vector<8x8xf32> to vector<8x1x8xf32>
    %c0_91 = arith.constant 0 : index
    %c7 = arith.constant 7 : index
    %c0_92 = arith.constant 0 : index
    %122 = vector.load %arg3[%c0_91, %c7, %c0_92] : memref<8x8x8xf32, #tpu.memory_space<vmem>>, vector<8x1x8xf32>
    tpu.vector_store %arg3[%c0_91, %c7, %c0_92], %121 {strides = array<i32>} : memref<8x8x8xf32, #tpu.memory_space<vmem>>, vector<8x1x8xf32>,
    return
  }
  func.func @transform_0(%arg0: i32) -> (i32, i32) {
    %c0_i32 = arith.constant 0 : i32
    %c0_i32_0 = arith.constant 0 : i32
    return %arg0, %c0_i32 : i32, i32
  }
  func.func @transform_1(%arg0: i32) -> (i32, i32) {
    %c0_i32 = arith.constant 0 : i32
    %c0_i32_0 = arith.constant 0 : i32
    %c0_i32_1 = arith.constant 0 : i32
    return %c0_i32, %c0_i32_0 : i32, i32
  }
  func.func @transform_2(%arg0: i32) -> (i32, i32, i32) {
    %c0_i32 = arith.constant 0 : i32
    %c0_i32_0 = arith.constant 0 : i32
    %c0_i32_1 = arith.constant 0 : i32
    return %arg0, %c0_i32, %c0_i32_0 : i32, i32, i32
  }
}

</mosaic_0001>

<llo_original>
// kernel: tpu_custom_call.1
$region0: #{tpu_custom_call.1}
  #allocation0 [shape = 'u32[]', space=smem, size = 0x4, offset = 0x4, fixed_abs, tag = 'smem constant byte address 0x4 - core index']
  #allocation1 [shape = 'u32[72,128]{1,0:T(1,128)}', space=vmem, size = 0x9000, scoped, tag = 'internal scratch']
  #allocation2 [shape = 'f32[8,18]{1,0:T(8,128)}', space=vmem, size = 0x1000, scoped, tag = 'scratch operand']
  %s0 = inlined_call_operand.vmem [shape: f32[8,256], index: 0, kind: input, shape index: {}]
  %s1 = inlined_call_operand.vmem [shape: f32[15,8], index: 1, kind: input, shape index: {}]
  %s2 = inlined_call_operand.hbm [shape: f32[8,8,8], index: 2, kind: output, shape index: {}]
  %s3 = sld [smem:[#allocation0]]
  $region18: #{tpu_custom_call.1} parent=0
    _
  %s5 = ssub.s32 1, %s3
  %s6 = scalar_select 0, %s5, %s3
  $region1: #{tpu_custom_call.1} parent=0
    #allocation3 [shape = 'u8[32768]{0}', space=vmem, size = 0x8000, scoped, tag = 'output window, operand 0, single buffered']
    #allocation4 [shape = 's32[1]{0}', space=sflag, size = 0x4, scoped, tag = 'scoped memory for tpu_custom_call.1']
    %7 = vsyncpa [#allocation4], 0
    // Predicated region
    $region2: #{tpu_custom_call.1} parent=1 // pred_check
      _
    $region3: #{tpu_custom_call.1} parent=1 // pred_check_branch
      %9 = sbr.rel (0) target = $region5
    $region4: #{tpu_custom_call.1} parent=1 // pred_region
      _
    $region5: #{tpu_custom_call.1} parent=1 // pred_fallthru
      _
    // Predicated region
    $region6: #{tpu_custom_call.1} parent=1 // pred_check
      _
    $region7: #{tpu_custom_call.1} parent=1 // pred_check_branch
      %11 = sbr.rel (0) target = $region9
    $region8: #{tpu_custom_call.1} parent=1 // pred_region
      _
    $region9: #{tpu_custom_call.1} parent=1 // pred_fallthru
      _
    %v12 = vld [vmem:[%s1] sm:$0xff]
    %v13 = vld [vmem:[%s1 + $0x8] sm:$0x7f]
    %vm14 = vcmask 7168
    %15 = vst.msk [vmem:[#allocation2] sm:$0xff] %vm14, -3.4028235e+38
    %vm16 = vcmask 146568
    %17 = vst.msk [vmem:[#allocation2] sm:$0xff] %vm16, -3.4028235e+38
    %v18 = vld [vmem:[%s0] sm:$0xff]
    %20 = vrot.lane.b32.xlu0 %v18, 112
    %v21 = vpop.permute.xlu0 %20
    %v23 = vmax.f32 %v18, %v21
    %25 = vrot.lane.b32.xlu0 %v23, 1
    %v26 = vpop.permute.xlu0 %25
    %vm28 = vcmask 138248
    %29 = vst.msk [vmem:[#allocation2] sm:$0xff] %vm28, %v26
    %v30 = vld [vmem:[#allocation2] sm:$0xff]
    %32 = vrot.lane.b32.xlu0 %v30, 127
    %v33 = vpop.permute.xlu0 %32
    %v35 = vmax.f32 %v30, %v33
    %36 = vrot.lane.b32.xlu0 %v30, 126
    %v37 = vpop.permute.xlu0 %36
    %v39 = vmax.f32 %v35, %v37
    %vm40 = vcmask 121856
    %v42 = vsel %vm40, %v39, 0
    %vm44 = vcmask 1046528
    %v46 = vsel %vm44, %v13, 0
    %48 = vmatpush.msra.mxu0 0.0
    %49 = vmatpush.msra.mxu0 0.0
    %50 = vmatpush.msra.mxu0 0.0
    %51 = vmatpush.msra.mxu0 0.0
    %52 = vmatpush.msra.mxu0 0.0
    %53 = vmatpush.msra.mxu0 0.0
    %54 = vmatpush.msra.mxu0 0.0
    %55 = vmatpush.msra.mxu0 0.0
    %56 = vmatpush.msra.mxu0 0.0
    %57 = vmatpush.msra.mxu0 0.0
    %58 = vmatpush.msra.mxu0 0.0
    %59 = vmatpush.msra.mxu0 0.0
    %60 = vmatpush.msra.mxu0 0.0
    %61 = vmatpush.msra.mxu0 0.0
    %v62 = vand.u32 %v46, 4294901760
    %63 = vmatpush.msra.mxu0 %v62
    %v64 = vand.u32 %v12, 4294901760
    %65 = vmatpush.msra.mxu0 %v64
    %v66 = vand.u32 %v42, 4294901760
    %v67 = vsub.f32 %v42, %v66
    %v68 = vand.u32 %v67, 4294901760
    %v69 = vsub.f32 %v67, %v68
    %v70 = vand.u32 %v69, 4294901760
    %71 = vmatmul.f32.gmra.mxu0 %v70
    %v72 = vpop.f32.mrf.mxu0
    %v73 = vadd.f32 0.0, %v72
    %74 = vdwg.mxu0
    %75 = vmatpush.msra.mxu0 0.0
    %76 = vmatpush.msra.mxu0 0.0
    %77 = vmatpush.msra.mxu0 0.0
    %78 = vmatpush.msra.mxu0 0.0
    %79 = vmatpush.msra.mxu0 0.0
    %80 = vmatpush.msra.mxu0 0.0
    %81 = vmatpush.msra.mxu0 0.0
    %82 = vmatpush.msra.mxu0 0.0
    %83 = vmatpush.msra.mxu0 0.0
    %84 = vmatpush.msra.mxu0 0.0
    %85 = vmatpush.msra.mxu0 0.0
    %86 = vmatpush.msra.mxu0 0.0
    %87 = vmatpush.msra.mxu0 0.0
    %88 = vmatpush.msra.mxu0 0.0
    %v89 = vand.u32 %v46, 4294901760
    %v90 = vsub.f32 %v46, %v89
    %v91 = vand.u32 %v90, 4294901760
    %v92 = vsub.f32 %v90, %v91
    %v93 = vand.u32 %v92, 4294901760
    %94 = vmatpush.msra.mxu0 %v93
    %v95 = vand.u32 %v12, 4294901760
    %v96 = vsub.f32 %v12, %v95
    %v97 = vand.u32 %v96, 4294901760
    %v98 = vsub.f32 %v96, %v97
    %v99 = vand.u32 %v98, 4294901760
    %100 = vmatpush.msra.mxu0 %v99
    %v101 = vand.u32 %v42, 4294901760
    %102 = vmatmul.f32.gmra.mxu0 %v101
    %v103 = vpop.f32.mrf.mxu0
    %v104 = vadd.f32 %v73, %v103
    %105 = vdwg.mxu0
    %106 = vmatpush.msra.mxu0 0.0
    %107 = vmatpush.msra.mxu0 0.0
    %108 = vmatpush.msra.mxu0 0.0
    %109 = vmatpush.msra.mxu0 0.0
    %110 = vmatpush.msra.mxu0 0.0
    %111 = vmatpush.msra.mxu0 0.0
    %112 = vmatpush.msra.mxu0 0.0
    %113 = vmatpush.msra.mxu0 0.0
    %114 = vmatpush.msra.mxu0 0.0
    %115 = vmatpush.msra.mxu0 0.0
    %116 = vmatpush.msra.mxu0 0.0
    %117 = vmatpush.msra.mxu0 0.0
    %118 = vmatpush.msra.mxu0 0.0
    %119 = vmatpush.msra.mxu0 0.0
    %v120 = vand.u32 %v46, 4294901760
    %v121 = vsub.f32 %v46, %v120
    %122 = vmatpush.msra.mxu0 %v121
    %v123 = vand.u32 %v12, 4294901760
    %v124 = vsub.f32 %v12, %v123
    %125 = vmatpush.msra.mxu0 %v124
    %v126 = vand.u32 %v42, 4294901760
    %v127 = vsub.f32 %v42, %v126
    %128 = vmatmul.f32.gmra.mxu0 %v127
    %v129 = vpop.f32.mrf.mxu0
    %v130 = vadd.f32 %v104, %v129
    %131 = vdwg.mxu0
    %132 = vmatpush.msra.mxu0 0.0
    %133 = vmatpush.msra.mxu0 0.0
    %134 = vmatpush.msra.mxu0 0.0
    %135 = vmatpush.msra.mxu0 0.0
    %136 = vmatpush.msra.mxu0 0.0
    %137 = vmatpush.msra.mxu0 0.0
    %138 = vmatpush.msra.mxu0 0.0
    %139 = vmatpush.msra.mxu0 0.0
    %140 = vmatpush.msra.mxu0 0.0
    %141 = vmatpush.msra.mxu0 0.0
    %142 = vmatpush.msra.mxu0 0.0
    %143 = vmatpush.msra.mxu0 0.0
    %144 = vmatpush.msra.mxu0 0.0
    %145 = vmatpush.msra.mxu0 0.0
    %v146 = vand.u32 %v46, 4294901760
    %147 = vmatpush.msra.mxu0 %v146
    %v148 = vand.u32 %v12, 4294901760
    %149 = vmatpush.msra.mxu0 %v148
    %v150 = vand.u32 %v42, 4294901760
    %v151 = vsub.f32 %v42, %v150
    %v152 = vand.u32 %v151, 4294901760
    %153 = vmatmul.f32.gmra.mxu0 %v152
    %v154 = vpop.f32.mrf.mxu0
    %v155 = vadd.f32 %v130, %v154
    %156 = vdwg.mxu0
    %157 = vmatpush.msra.mxu0 0.0
    %158 = vmatpush.msra.mxu0 0.0
    %159 = vmatpush.msra.mxu0 0.0
    %160 = vmatpush.msra.mxu0 0.0
    %161 = vmatpush.msra.mxu0 0.0
    %162 = vmatpush.msra.mxu0 0.0
    %163 = vmatpush.msra.mxu0 0.0
    %164 = vmatpush.msra.mxu0 0.0
    %165 = vmatpush.msra.mxu0 0.0
    %166 = vmatpush.msra.mxu0 0.0
    %167 = vmatpush.msra.mxu0 0.0
    %168 = vmatpush.msra.mxu0 0.0
    %169 = vmatpush.msra.mxu0 0.0
    %170 = vmatpush.msra.mxu0 0.0
    %v171 = vand.u32 %v46, 4294901760
    %v172 = vsub.f32 %v46, %v171
    %v173 = vand.u32 %v172, 4294901760
    %174 = vmatpush.msra.mxu0 %v173
    %v175 = vand.u32 %v12, 4294901760
    %v176 = vsub.f32 %v12, %v175
    %v177 = vand.u32 %v176, 4294901760
    %178 = vmatpush.msra.mxu0 %v177
    %v179 = vand.u32 %v42, 4294901760
    %180 = vmatmul.f32.gmra.mxu0 %v179
    %v181 = vpop.f32.mrf.mxu0
    %v182 = vadd.f32 %v155, %v181
    %183 = vdwg.mxu0
    %184 = vmatpush.msra.mxu0 0.0
    %185 = vmatpush.msra.mxu0 0.0
    %186 = vmatpush.msra.mxu0 0.0
    %187 = vmatpush.msra.mxu0 0.0
    %188 = vmatpush.msra.mxu0 0.0
    %189 = vmatpush.msra.mxu0 0.0
    %190 = vmatpush.msra.mxu0 0.0
    %191 = vmatpush.msra.mxu0 0.0
    %192 = vmatpush.msra.mxu0 0.0
    %193 = vmatpush.msra.mxu0 0.0
    %194 = vmatpush.msra.mxu0 0.0
    %195 = vmatpush.msra.mxu0 0.0
    %196 = vmatpush.msra.mxu0 0.0
    %197 = vmatpush.msra.mxu0 0.0
    %v198 = vand.u32 %v46, 4294901760
    %199 = vmatpush.msra.mxu0 %v198
    %v200 = vand.u32 %v12, 4294901760
    %201 = vmatpush.msra.mxu0 %v200
    %v202 = vand.u32 %v42, 4294901760
    %203 = vmatmul.f32.gmra.mxu0 %v202
    %v204 = vpop.f32.mrf.mxu0
    %v205 = vadd.f32 %v182, %v204
    %206 = vdwg.mxu0
    %v208 = vrot.slane %v205, 1
    %v209 = vrot.slane %v205, 2
    %v210 = vrot.slane %v205, 3
    %v211 = vrot.slane %v205, 4
    %v212 = vrot.slane %v205, 5
    %v213 = vrot.slane %v205, 6
    %v214 = vrot.slane %v205, 7
    %vm222 = vcmask 57344
    %223 = vst.msk [vmem:[#allocation3] sm:$0x1] %vm222, %v205
    %224 = vst.msk [vmem:[#allocation3 + $0x8] sm:$0x1] %vm222, %v208
    %225 = vst.msk [vmem:[#allocation3 + $0x10] sm:$0x1] %vm222, %v209
    %226 = vst.msk [vmem:[#allocation3 + $0x18] sm:$0x1] %vm222, %v210
    %227 = vst.msk [vmem:[#allocation3 + $0x20] sm:$0x1] %vm222, %v211
    %228 = vst.msk [vmem:[#allocation3 + $0x28] sm:$0x1] %vm222, %v212
    %229 = vst.msk [vmem:[#allocation3 + $0x30] sm:$0x1] %vm222, %v213
    %230 = vst.msk [vmem:[#allocation3 + $0x38] sm:$0x1] %vm222, %v214
    %v231 = vld [vmem:[%s0] sm:$0xff]
    %233 = vrot.lane.b32.xlu0 %v231, 112
    %v234 = vpop.permute.xlu0 %233
    %v236 = vmax.f32 %v231, %v234
    %237 = vrot.lane.b32.xlu0 %v231, 96
    %v238 = vpop.permute.xlu0 %237
    %v240 = vmax.f32 %v236, %v238
    %242 = vrot.lane.b32.xlu0 %v240, 113
    %v243 = vpop.permute.xlu0 %242
    %245 = vst.msk [vmem:[#allocation2] sm:$0xff] %vm28, %v243
    %v246 = vld [vmem:[#allocation2] sm:$0xff]
    %248 = vrot.lane.b32.xlu0 %v246, 127
    %v249 = vpop.permute.xlu0 %248
    %v251 = vmax.f32 %v246, %v249
    %252 = vrot.lane.b32.xlu0 %v246, 126
    %v253 = vpop.permute.xlu0 %252
    %v255 = vmax.f32 %v251, %v253
    %v257 = vsel %vm40, %v255, 0
    %259 = vmatpush.msra.mxu0 0.0
    %260 = vmatpush.msra.mxu0 0.0
    %261 = vmatpush.msra.mxu0 0.0
    %262 = vmatpush.msra.mxu0 0.0
    %263 = vmatpush.msra.mxu0 0.0
    %264 = vmatpush.msra.mxu0 0.0
    %265 = vmatpush.msra.mxu0 0.0
    %266 = vmatpush.msra.mxu0 0.0
    %267 = vmatpush.msra.mxu0 0.0
    %268 = vmatpush.msra.mxu0 0.0
    %269 = vmatpush.msra.mxu0 0.0
    %270 = vmatpush.msra.mxu0 0.0
    %271 = vmatpush.msra.mxu0 0.0
    %272 = vmatpush.msra.mxu0 0.0
    %v273 = vand.u32 %v46, 4294901760
    %274 = vmatpush.msra.mxu0 %v273
    %v275 = vand.u32 %v12, 4294901760
    %276 = vmatpush.msra.mxu0 %v275
    %v277 = vand.u32 %v257, 4294901760
    %v278 = vsub.f32 %v257, %v277
    %v279 = vand.u32 %v278, 4294901760
    %v280 = vsub.f32 %v278, %v279
    %v281 = vand.u32 %v280, 4294901760
    %282 = vmatmul.f32.gmra.mxu0 %v281
    %v283 = vpop.f32.mrf.mxu0
    %v284 = vadd.f32 0.0, %v283
    %285 = vdwg.mxu0
    %286 = vmatpush.msra.mxu0 0.0
    %287 = vmatpush.msra.mxu0 0.0
    %288 = vmatpush.msra.mxu0 0.0
    %289 = vmatpush.msra.mxu0 0.0
    %290 = vmatpush.msra.mxu0 0.0
    %291 = vmatpush.msra.mxu0 0.0
    %292 = vmatpush.msra.mxu0 0.0
    %293 = vmatpush.msra.mxu0 0.0
    %294 = vmatpush.msra.mxu0 0.0
    %295 = vmatpush.msra.mxu0 0.0
    %296 = vmatpush.msra.mxu0 0.0
    %297 = vmatpush.msra.mxu0 0.0
    %298 = vmatpush.msra.mxu0 0.0
    %299 = vmatpush.msra.mxu0 0.0
    %v300 = vand.u32 %v46, 4294901760
    %v301 = vsub.f32 %v46, %v300
    %v302 = vand.u32 %v301, 4294901760
    %v303 = vsub.f32 %v301, %v302
    %v304 = vand.u32 %v303, 4294901760
    %305 = vmatpush.msra.mxu0 %v304
    %v306 = vand.u32 %v12, 4294901760
    %v307 = vsub.f32 %v12, %v306
    %v308 = vand.u32 %v307, 4294901760
    %v309 = vsub.f32 %v307, %v308
    %v310 = vand.u32 %v309, 4294901760
    %311 = vmatpush.msra.mxu0 %v310
    %v312 = vand.u32 %v257, 4294901760
    %313 = vmatmul.f32.gmra.mxu0 %v312
    %v314 = vpop.f32.mrf.mxu0
    %v315 = vadd.f32 %v284, %v314
    %316 = vdwg.mxu0
    %317 = vmatpush.msra.mxu0 0.0
    %318 = vmatpush.msra.mxu0 0.0
    %319 = vmatpush.msra.mxu0 0.0
    %320 = vmatpush.msra.mxu0 0.0
    %321 = vmatpush.msra.mxu0 0.0
    %322 = vmatpush.msra.mxu0 0.0
    %323 = vmatpush.msra.mxu0 0.0
    %324 = vmatpush.msra.mxu0 0.0
    %325 = vmatpush.msra.mxu0 0.0
    %326 = vmatpush.msra.mxu0 0.0
    %327 = vmatpush.msra.mxu0 0.0
    %328 = vmatpush.msra.mxu0 0.0
    %329 = vmatpush.msra.mxu0 0.0
    %330 = vmatpush.msra.mxu0 0.0
    %v331 = vand.u32 %v46, 4294901760
    %v332 = vsub.f32 %v46, %v331
    %333 = vmatpush.msra.mxu0 %v332
    %v334 = vand.u32 %v12, 4294901760
    %v335 = vsub.f32 %v12, %v334
    %336 = vmatpush.msra.mxu0 %v335
    %v337 = vand.u32 %v257, 4294901760
    %v338 = vsub.f32 %v257, %v337
    %339 = vmatmul.f32.gmra.mxu0 %v338
    %v340 = vpop.f32.mrf.mxu0
    %v341 = vadd.f32 %v315, %v340
    %342 = vdwg.mxu0
    %343 = vmatpush.msra.mxu0 0.0
    %344 = vmatpush.msra.mxu0 0.0
    %345 = vmatpush.msra.mxu0 0.0
    %346 = vmatpush.msra.mxu0 0.0
    %347 = vmatpush.msra.mxu0 0.0
    %348 = vmatpush.msra.mxu0 0.0
    %349 = vmatpush.msra.mxu0 0.0
    %350 = vmatpush.msra.mxu0 0.0
    %351 = vmatpush.msra.mxu0 0.0
    %352 = vmatpush.msra.mxu0 0.0
    %353 = vmatpush.msra.mxu0 0.0
    %354 = vmatpush.msra.mxu0 0.0
    %355 = vmatpush.msra.mxu0 0.0
    %356 = vmatpush.msra.mxu0 0.0
    %v357 = vand.u32 %v46, 4294901760
    %358 = vmatpush.msra.mxu0 %v357
    %v359 = vand.u32 %v12, 4294901760
    %360 = vmatpush.msra.mxu0 %v359
    %v361 = vand.u32 %v257, 4294901760
    %v362 = vsub.f32 %v257, %v361
    %v363 = vand.u32 %v362, 4294901760
    %364 = vmatmul.f32.gmra.mxu0 %v363
    %v365 = vpop.f32.mrf.mxu0
    %v366 = vadd.f32 %v341, %v365
    %367 = vdwg.mxu0
    %368 = vmatpush.msra.mxu0 0.0
    %369 = vmatpush.msra.mxu0 0.0
    %370 = vmatpush.msra.mxu0 0.0
    %371 = vmatpush.msra.mxu0 0.0
    %372 = vmatpush.msra.mxu0 0.0
    %373 = vmatpush.msra.mxu0 0.0
    %374 = vmatpush.msra.mxu0 0.0
    %375 = vmatpush.msra.mxu0 0.0
    %376 = vmatpush.msra.mxu0 0.0
    %377 = vmatpush.msra.mxu0 0.0
    %378 = vmatpush.msra.mxu0 0.0
    %379 = vmatpush.msra.mxu0 0.0
    %380 = vmatpush.msra.mxu0 0.0
    %381 = vmatpush.msra.mxu0 0.0
    %v382 = vand.u32 %v46, 4294901760
    %v383 = vsub.f32 %v46, %v382
    %v384 = vand.u32 %v383, 4294901760
    %385 = vmatpush.msra.mxu0 %v384
    %v386 = vand.u32 %v12, 4294901760
    %v387 = vsub.f32 %v12, %v386
    %v388 = vand.u32 %v387, 4294901760
    %389 = vmatpush.msra.mxu0 %v388
    %v390 = vand.u32 %v257, 4294901760
    %391 = vmatmul.f32.gmra.mxu0 %v390
    %v392 = vpop.f32.mrf.mxu0
    %v393 = vadd.f32 %v366, %v392
    %394 = vdwg.mxu0
    %395 = vmatpush.msra.mxu0 0.0
    %396 = vmatpush.msra.mxu0 0.0
    %397 = vmatpush.msra.mxu0 0.0
    %398 = vmatpush.msra.mxu0 0.0
    %399 = vmatpush.msra.mxu0 0.0
    %400 = vmatpush.msra.mxu0 0.0
    %401 = vmatpush.msra.mxu0 0.0
    %402 = vmatpush.msra.mxu0 0.0
    %403 = vmatpush.msra.mxu0 0.0
    %404 = vmatpush.msra.mxu0 0.0
    %405 = vmatpush.msra.mxu0 0.0
    %406 = vmatpush.msra.mxu0 0.0
    %407 = vmatpush.msra.mxu0 0.0
    %408 = vmatpush.msra.mxu0 0.0
    %v409 = vand.u32 %v46, 4294901760
    %410 = vmatpush.msra.mxu0 %v409
    %v411 = vand.u32 %v12, 4294901760
    %412 = vmatpush.msra.mxu0 %v411
    %v413 = vand.u32 %v257, 4294901760
    %414 = vmatmul.f32.gmra.mxu0 %v413
    %v415 = vpop.f32.mrf.mxu0
    %v416 = vadd.f32 %v393, %v415
    %417 = vdwg.mxu0
    %v419 = vrot.slane %v416, 1
    %v420 = vrot.slane %v416, 2
    %v421 = vrot.slane %v416, 3
    %v422 = vrot.slane %v416, 4
    %v423 = vrot.slane %v416, 5
    %v424 = vrot.slane %v416, 6
    %v425 = vrot.slane %v416, 7
    %433 = vst.msk [vmem:[#allocation3 + $0x1] sm:$0x1] %vm222, %v416
    %434 = vst.msk [vmem:[#allocation3 + $0x9] sm:$0x1] %vm222, %v419
    %435 = vst.msk [vmem:[#allocation3 + $0x11] sm:$0x1] %vm222, %v420
    %436 = vst.msk [vmem:[#allocation3 + $0x19] sm:$0x1] %vm222, %v421
    %437 = vst.msk [vmem:[#allocation3 + $0x21] sm:$0x1] %vm222, %v422
    %438 = vst.msk [vmem:[#allocation3 + $0x29] sm:$0x1] %vm222, %v423
    %439 = vst.msk [vmem:[#allocation3 + $0x31] sm:$0x1] %vm222, %v424
    %440 = vst.msk [vmem:[#allocation3 + $0x39] sm:$0x1] %vm222, %v425
    %v441 = vld [vmem:[%s0] sm:$0xff]
    %443 = vrot.lane.b32.xlu0 %v441, 112
    %v444 = vpop.permute.xlu0 %443
    %v446 = vmax.f32 %v441, %v444
    %447 = vrot.lane.b32.xlu0 %v441, 96
    %v448 = vpop.permute.xlu0 %447
    %v450 = vmax.f32 %v446, %v448
    %452 = vrot.lane.b32.xlu0 %v450, 81
    %v453 = vpop.permute.xlu0 %452
    %455 = vst.msk [vmem:[#allocation2] sm:$0xff] %vm28, %v453
    %v456 = vld [vmem:[#allocation2] sm:$0xff]
    %458 = vrot.lane.b32.xlu0 %v456, 127
    %v459 = vpop.permute.xlu0 %458
    %v461 = vmax.f32 %v456, %v459
    %462 = vrot.lane.b32.xlu0 %v456, 126
    %v463 = vpop.permute.xlu0 %462
    %v465 = vmax.f32 %v461, %v463
    %v467 = vsel %vm40, %v465, 0
    %469 = vmatpush.msra.mxu0 0.0
    %470 = vmatpush.msra.mxu0 0.0
    %471 = vmatpush.msra.mxu0 0.0
    %472 = vmatpush.msra.mxu0 0.0
    %473 = vmatpush.msra.mxu0 0.0
    %474 = vmatpush.msra.mxu0 0.0
    %475 = vmatpush.msra.mxu0 0.0
    %476 = vmatpush.msra.mxu0 0.0
    %477 = vmatpush.msra.mxu0 0.0
    %478 = vmatpush.msra.mxu0 0.0
    %479 = vmatpush.msra.mxu0 0.0
    %480 = vmatpush.msra.mxu0 0.0
    %481 = vmatpush.msra.mxu0 0.0
    %482 = vmatpush.msra.mxu0 0.0
    %v483 = vand.u32 %v46, 4294901760
    %484 = vmatpush.msra.mxu0 %v483
    %v485 = vand.u32 %v12, 4294901760
    %486 = vmatpush.msra.mxu0 %v485
    %v487 = vand.u32 %v467, 4294901760
    %v488 = vsub.f32 %v467, %v487
    %v489 = vand.u32 %v488, 4294901760
    %v490 = vsub.f32 %v488, %v489
    %v491 = vand.u32 %v490, 4294901760
    %492 = vmatmul.f32.gmra.mxu0 %v491
    %v493 = vpop.f32.mrf.mxu0
    %v494 = vadd.f32 0.0, %v493
    %495 = vdwg.mxu0
    %496 = vmatpush.msra.mxu0 0.0
    %497 = vmatpush.msra.mxu0 0.0
    %498 = vmatpush.msra.mxu0 0.0
    %499 = vmatpush.msra.mxu0 0.0
    %500 = vmatpush.msra.mxu0 0.0
    %501 = vmatpush.msra.mxu0 0.0
    %502 = vmatpush.msra.mxu0 0.0
    %503 = vmatpush.msra.mxu0 0.0
    %504 = vmatpush.msra.mxu0 0.0
    %505 = vmatpush.msra.mxu0 0.0
    %506 = vmatpush.msra.mxu0 0.0
    %507 = vmatpush.msra.mxu0 0.0
    %508 = vmatpush.msra.mxu0 0.0
    %509 = vmatpush.msra.mxu0 0.0
    %v510 = vand.u32 %v46, 4294901760
    %v511 = vsub.f32 %v46, %v510
    %v512 = vand.u32 %v511, 4294901760
    %v513 = vsub.f32 %v511, %v512
    %v514 = vand.u32 %v513, 4294901760
    %515 = vmatpush.msra.mxu0 %v514
    %v516 = vand.u32 %v12, 4294901760
    %v517 = vsub.f32 %v12, %v516
    %v518 = vand.u32 %v517, 4294901760
    %v519 = vsub.f32 %v517, %v518
    %v520 = vand.u32 %v519, 4294901760
    %521 = vmatpush.msra.mxu0 %v520
    %v522 = vand.u32 %v467, 4294901760
    %523 = vmatmul.f32.gmra.mxu0 %v522
    %v524 = vpop.f32.mrf.mxu0
    %v525 = vadd.f32 %v494, %v524
    %526 = vdwg.mxu0
    %527 = vmatpush.msra.mxu0 0.0
    %528 = vmatpush.msra.mxu0 0.0
    %529 = vmatpush.msra.mxu0 0.0
    %530 = vmatpush.msra.mxu0 0.0
    %531 = vmatpush.msra.mxu0 0.0
    %532 = vmatpush.msra.mxu0 0.0
    %533 = vmatpush.msra.mxu0 0.0
    %534 = vmatpush.msra.mxu0 0.0
    %535 = vmatpush.msra.mxu0 0.0
    %536 = vmatpush.msra.mxu0 0.0
    %537 = vmatpush.msra.mxu0 0.0
    %538 = vmatpush.msra.mxu0 0.0
    %539 = vmatpush.msra.mxu0 0.0
    %540 = vmatpush.msra.mxu0 0.0
    %v541 = vand.u32 %v46, 4294901760
    %v542 = vsub.f32 %v46, %v541
    %543 = vmatpush.msra.mxu0 %v542
    %v544 = vand.u32 %v12, 4294901760
    %v545 = vsub.f32 %v12, %v544
    %546 = vmatpush.msra.mxu0 %v545
    %v547 = vand.u32 %v467, 4294901760
    %v548 = vsub.f32 %v467, %v547
    %549 = vmatmul.f32.gmra.mxu0 %v548
    %v550 = vpop.f32.mrf.mxu0
    %v551 = vadd.f32 %v525, %v550
    %552 = vdwg.mxu0
    %553 = vmatpush.msra.mxu0 0.0
    %554 = vmatpush.msra.mxu0 0.0
    %555 = vmatpush.msra.mxu0 0.0
    %556 = vmatpush.msra.mxu0 0.0
    %557 = vmatpush.msra.mxu0 0.0
    %558 = vmatpush.msra.mxu0 0.0
    %559 = vmatpush.msra.mxu0 0.0
    %560 = vmatpush.msra.mxu0 0.0
    %561 = vmatpush.msra.mxu0 0.0
    %562 = vmatpush.msra.mxu0 0.0
    %563 = vmatpush.msra.mxu0 0.0
    %564 = vmatpush.msra.mxu0 0.0
    %565 = vmatpush.msra.mxu0 0.0
    %566 = vmatpush.msra.mxu0 0.0
    %v567 = vand.u32 %v46, 4294901760
    %568 = vmatpush.msra.mxu0 %v567
    %v569 = vand.u32 %v12, 4294901760
    %570 = vmatpush.msra.mxu0 %v569
    %v571 = vand.u32 %v467, 4294901760
    %v572 = vsub.f32 %v467, %v571
    %v573 = vand.u32 %v572, 4294901760
    %574 = vmatmul.f32.gmra.mxu0 %v573
    %v575 = vpop.f32.mrf.mxu0
    %v576 = vadd.f32 %v551, %v575
    %577 = vdwg.mxu0
    %578 = vmatpush.msra.mxu0 0.0
    %579 = vmatpush.msra.mxu0 0.0
    %580 = vmatpush.msra.mxu0 0.0
    %581 = vmatpush.msra.mxu0 0.0
    %582 = vmatpush.msra.mxu0 0.0
    %583 = vmatpush.msra.mxu0 0.0
    %584 = vmatpush.msra.mxu0 0.0
    %585 = vmatpush.msra.mxu0 0.0
    %586 = vmatpush.msra.mxu0 0.0
    %587 = vmatpush.msra.mxu0 0.0
    %588 = vmatpush.msra.mxu0 0.0
    %589 = vmatpush.msra.mxu0 0.0
    %590 = vmatpush.msra.mxu0 0.0
    %591 = vmatpush.msra.mxu0 0.0
    %v592 = vand.u32 %v46, 4294901760
    %v593 = vsub.f32 %v46, %v592
    %v594 = vand.u32 %v593, 4294901760
    %595 = vmatpush.msra.mxu0 %v594
    %v596 = vand.u32 %v12, 4294901760
    %v597 = vsub.f32 %v12, %v596
    %v598 = vand.u32 %v597, 4294901760
    %599 = vmatpush.msra.mxu0 %v598
    %v600 = vand.u32 %v467, 4294901760
    %601 = vmatmul.f32.gmra.mxu0 %v600
    %v602 = vpop.f32.mrf.mxu0
    %v603 = vadd.f32 %v576, %v602
    %604 = vdwg.mxu0
    %605 = vmatpush.msra.mxu0 0.0
    %606 = vmatpush.msra.mxu0 0.0
    %607 = vmatpush.msra.mxu0 0.0
    %608 = vmatpush.msra.mxu0 0.0
    %609 = vmatpush.msra.mxu0 0.0
    %610 = vmatpush.msra.mxu0 0.0
    %611 = vmatpush.msra.mxu0 0.0
    %612 = vmatpush.msra.mxu0 0.0
    %613 = vmatpush.msra.mxu0 0.0
    %614 = vmatpush.msra.mxu0 0.0
    %615 = vmatpush.msra.mxu0 0.0
    %616 = vmatpush.msra.mxu0 0.0
    %617 = vmatpush.msra.mxu0 0.0
    %618 = vmatpush.msra.mxu0 0.0
    %v619 = vand.u32 %v46, 4294901760
    %620 = vmatpush.msra.mxu0 %v619
    %v621 = vand.u32 %v12, 4294901760
    %622 = vmatpush.msra.mxu0 %v621
    %v623 = vand.u32 %v467, 4294901760
    %624 = vmatmul.f32.gmra.mxu0 %v623
    %v625 = vpop.f32.mrf.mxu0
    %v626 = vadd.f32 %v603, %v625
    %627 = vdwg.mxu0
    %v629 = vrot.slane %v626, 1
    %v630 = vrot.slane %v626, 2
    %v631 = vrot.slane %v626, 3
    %v632 = vrot.slane %v626, 4
    %v633 = vrot.slane %v626, 5
    %v634 = vrot.slane %v626, 6
    %v635 = vrot.slane %v626, 7
    %643 = vst.msk [vmem:[#allocation3 + $0x2] sm:$0x1] %vm222, %v626
    %644 = vst.msk [vmem:[#allocation3 + $0xa] sm:$0x1] %vm222, %v629
    %645 = vst.msk [vmem:[#allocation3 + $0x12] sm:$0x1] %vm222, %v630
    %646 = vst.msk [vmem:[#allocation3 + $0x1a] sm:$0x1] %vm222, %v631
    %647 = vst.msk [vmem:[#allocation3 + $0x22] sm:$0x1] %vm222, %v632
    %648 = vst.msk [vmem:[#allocation3 + $0x2a] sm:$0x1] %vm222, %v633
    %649 = vst.msk [vmem:[#allocation3 + $0x32] sm:$0x1] %vm222, %v634
    %650 = vst.msk [vmem:[#allocation3 + $0x3a] sm:$0x1] %vm222, %v635
    %v651 = vld [vmem:[%s0] sm:$0xff]
    %653 = vrot.lane.b32.xlu0 %v651, 112
    %v654 = vpop.permute.xlu0 %653
    %v656 = vmax.f32 %v651, %v654
    %657 = vrot.lane.b32.xlu0 %v651, 96
    %v658 = vpop.permute.xlu0 %657
    %v660 = vmax.f32 %v656, %v658
    %662 = vrot.lane.b32.xlu0 %v660, 49
    %v663 = vpop.permute.xlu0 %662
    %665 = vst.msk [vmem:[#allocation2] sm:$0xff] %vm28, %v663
    %v666 = vld [vmem:[#allocation2] sm:$0xff]
    %668 = vrot.lane.b32.xlu0 %v666, 127
    %v669 = vpop.permute.xlu0 %668
    %v671 = vmax.f32 %v666, %v669
    %672 = vrot.lane.b32.xlu0 %v666, 126
    %v673 = vpop.permute.xlu0 %672
    %v675 = vmax.f32 %v671, %v673
    %v677 = vsel %vm40, %v675, 0
    %679 = vmatpush.msra.mxu0 0.0
    %680 = vmatpush.msra.mxu0 0.0
    %681 = vmatpush.msra.mxu0 0.0
    %682 = vmatpush.msra.mxu0 0.0
    %683 = vmatpush.msra.mxu0 0.0
    %684 = vmatpush.msra.mxu0 0.0
    %685 = vmatpush.msra.mxu0 0.0
    %686 = vmatpush.msra.mxu0 0.0
    %687 = vmatpush.msra.mxu0 0.0
    %688 = vmatpush.msra.mxu0 0.0
    %689 = vmatpush.msra.mxu0 0.0
    %690 = vmatpush.msra.mxu0 0.0
    %691 = vmatpush.msra.mxu0 0.0
    %692 = vmatpush.msra.mxu0 0.0
    %v693 = vand.u32 %v46, 4294901760
    %694 = vmatpush.msra.mxu0 %v693
    %v695 = vand.u32 %v12, 4294901760
    %696 = vmatpush.msra.mxu0 %v695
    %v697 = vand.u32 %v677, 4294901760
    %v698 = vsub.f32 %v677, %v697
    %v699 = vand.u32 %v698, 4294901760
    %v700 = vsub.f32 %v698, %v699
    %v701 = vand.u32 %v700, 4294901760
    %702 = vmatmul.f32.gmra.mxu0 %v701
    %v703 = vpop.f32.mrf.mxu0
    %v704 = vadd.f32 0.0, %v703
    %705 = vdwg.mxu0
    %706 = vmatpush.msra.mxu0 0.0
    %707 = vmatpush.msra.mxu0 0.0
    %708 = vmatpush.msra.mxu0 0.0
    %709 = vmatpush.msra.mxu0 0.0
    %710 = vmatpush.msra.mxu0 0.0
    %711 = vmatpush.msra.mxu0 0.0
    %712 = vmatpush.msra.mxu0 0.0
    %713 = vmatpush.msra.mxu0 0.0
    %714 = vmatpush.msra.mxu0 0.0
    %715 = vmatpush.msra.mxu0 0.0
    %716 = vmatpush.msra.mxu0 0.0
    %717 = vmatpush.msra.mxu0 0.0
    %718 = vmatpush.msra.mxu0 0.0
    %719 = vmatpush.msra.mxu0 0.0
    %v720 = vand.u32 %v46, 4294901760
    %v721 = vsub.f32 %v46, %v720
    %v722 = vand.u32 %v721, 4294901760
    %v723 = vsub.f32 %v721, %v722
    %v724 = vand.u32 %v723, 4294901760
    %725 = vmatpush.msra.mxu0 %v724
    %v726 = vand.u32 %v12, 4294901760
    %v727 = vsub.f32 %v12, %v726
    %v728 = vand.u32 %v727, 4294901760
    %v729 = vsub.f32 %v727, %v728
    %v730 = vand.u32 %v729, 4294901760
    %731 = vmatpush.msra.mxu0 %v730
    %v732 = vand.u32 %v677, 4294901760
    %733 = vmatmul.f32.gmra.mxu0 %v732
    %v734 = vpop.f32.mrf.mxu0
    %v735 = vadd.f32 %v704, %v734
    %736 = vdwg.mxu0
    %737 = vmatpush.msra.mxu0 0.0
    %738 = vmatpush.msra.mxu0 0.0
    %739 = vmatpush.msra.mxu0 0.0
    %740 = vmatpush.msra.mxu0 0.0
    %741 = vmatpush.msra.mxu0 0.0
    %742 = vmatpush.msra.mxu0 0.0
    %743 = vmatpush.msra.mxu0 0.0
    %744 = vmatpush.msra.mxu0 0.0
    %745 = vmatpush.msra.mxu0 0.0
    %746 = vmatpush.msra.mxu0 0.0
    %747 = vmatpush.msra.mxu0 0.0
    %748 = vmatpush.msra.mxu0 0.0
    %749 = vmatpush.msra.mxu0 0.0
    %750 = vmatpush.msra.mxu0 0.0
    %v751 = vand.u32 %v46, 4294901760
    %v752 = vsub.f32 %v46, %v751
    %753 = vmatpush.msra.mxu0 %v752
    %v754 = vand.u32 %v12, 4294901760
    %v755 = vsub.f32 %v12, %v754
    %756 = vmatpush.msra.mxu0 %v755
    %v757 = vand.u32 %v677, 4294901760
    %v758 = vsub.f32 %v677, %v757
    %759 = vmatmul.f32.gmra.mxu0 %v758
    %v760 = vpop.f32.mrf.mxu0
    %v761 = vadd.f32 %v735, %v760
    %762 = vdwg.mxu0
    %763 = vmatpush.msra.mxu0 0.0
    %764 = vmatpush.msra.mxu0 0.0
    %765 = vmatpush.msra.mxu0 0.0
    %766 = vmatpush.msra.mxu0 0.0
    %767 = vmatpush.msra.mxu0 0.0
    %768 = vmatpush.msra.mxu0 0.0
    %769 = vmatpush.msra.mxu0 0.0
    %770 = vmatpush.msra.mxu0 0.0
    %771 = vmatpush.msra.mxu0 0.0
    %772 = vmatpush.msra.mxu0 0.0
    %773 = vmatpush.msra.mxu0 0.0
    %774 = vmatpush.msra.mxu0 0.0
    %775 = vmatpush.msra.mxu0 0.0
    %776 = vmatpush.msra.mxu0 0.0
    %v777 = vand.u32 %v46, 4294901760
    %778 = vmatpush.msra.mxu0 %v777
    %v779 = vand.u32 %v12, 4294901760
    %780 = vmatpush.msra.mxu0 %v779
    %v781 = vand.u32 %v677, 4294901760
    %v782 = vsub.f32 %v677, %v781
    %v783 = vand.u32 %v782, 4294901760
    %784 = vmatmul.f32.gmra.mxu0 %v783
    %v785 = vpop.f32.mrf.mxu0
    %v786 = vadd.f32 %v761, %v785
    %787 = vdwg.mxu0
    %788 = vmatpush.msra.mxu0 0.0
    %789 = vmatpush.msra.mxu0 0.0
    %790 = vmatpush.msra.mxu0 0.0
    %791 = vmatpush.msra.mxu0 0.0
    %792 = vmatpush.msra.mxu0 0.0
    %793 = vmatpush.msra.mxu0 0.0
    %794 = vmatpush.msra.mxu0 0.0
    %795 = vmatpush.msra.mxu0 0.0
    %796 = vmatpush.msra.mxu0 0.0
    %797 = vmatpush.msra.mxu0 0.0
    %798 = vmatpush.msra.mxu0 0.0
    %799 = vmatpush.msra.mxu0 0.0
    %800 = vmatpush.msra.mxu0 0.0
    %801 = vmatpush.msra.mxu0 0.0
    %v802 = vand.u32 %v46, 4294901760
    %v803 = vsub.f32 %v46, %v802
    %v804 = vand.u32 %v803, 4294901760
    %805 = vmatpush.msra.mxu0 %v804
    %v806 = vand.u32 %v12, 4294901760
    %v807 = vsub.f32 %v12, %v806
    %v808 = vand.u32 %v807, 4294901760
    %809 = vmatpush.msra.mxu0 %v808
    %v810 = vand.u32 %v677, 4294901760
    %811 = vmatmul.f32.gmra.mxu0 %v810
    %v812 = vpop.f32.mrf.mxu0
    %v813 = vadd.f32 %v786, %v812
    %814 = vdwg.mxu0
    %815 = vmatpush.msra.mxu0 0.0
    %816 = vmatpush.msra.mxu0 0.0
    %817 = vmatpush.msra.mxu0 0.0
    %818 = vmatpush.msra.mxu0 0.0
    %819 = vmatpush.msra.mxu0 0.0
    %820 = vmatpush.msra.mxu0 0.0
    %821 = vmatpush.msra.mxu0 0.0
    %822 = vmatpush.msra.mxu0 0.0
    %823 = vmatpush.msra.mxu0 0.0
    %824 = vmatpush.msra.mxu0 0.0
    %825 = vmatpush.msra.mxu0 0.0
    %826 = vmatpush.msra.mxu0 0.0
    %827 = vmatpush.msra.mxu0 0.0
    %828 = vmatpush.msra.mxu0 0.0
    %v829 = vand.u32 %v46, 4294901760
    %830 = vmatpush.msra.mxu0 %v829
    %v831 = vand.u32 %v12, 4294901760
    %832 = vmatpush.msra.mxu0 %v831
    %v833 = vand.u32 %v677, 4294901760
    %834 = vmatmul.f32.gmra.mxu0 %v833
    %v835 = vpop.f32.mrf.mxu0
    %v836 = vadd.f32 %v813, %v835
    %837 = vdwg.mxu0
    %v839 = vrot.slane %v836, 1
    %v840 = vrot.slane %v836, 2
    %v841 = vrot.slane %v836, 3
    %v842 = vrot.slane %v836, 4
    %v843 = vrot.slane %v836, 5
    %v844 = vrot.slane %v836, 6
    %v845 = vrot.slane %v836, 7
    %853 = vst.msk [vmem:[#allocation3 + $0x3] sm:$0x1] %vm222, %v836
    %854 = vst.msk [vmem:[#allocation3 + $0xb] sm:$0x1] %vm222, %v839
    %855 = vst.msk [vmem:[#allocation3 + $0x13] sm:$0x1] %vm222, %v840
    %856 = vst.msk [vmem:[#allocation3 + $0x1b] sm:$0x1] %vm222, %v841
    %857 = vst.msk [vmem:[#allocation3 + $0x23] sm:$0x1] %vm222, %v842
    %858 = vst.msk [vmem:[#allocation3 + $0x2b] sm:$0x1] %vm222, %v843
    %859 = vst.msk [vmem:[#allocation3 + $0x33] sm:$0x1] %vm222, %v844
    %860 = vst.msk [vmem:[#allocation3 + $0x3b] sm:$0x1] %vm222, %v845
    %v861 = vld [vmem:[%s0] sm:$0xff]
    %v862 = vld [vmem:[%s0 + $0x8] sm:$0xff]
    %864 = vrot.lane.b32.xlu0 %v862, 112
    %v865 = vpop.permute.xlu0 %864
    %v867 = vmax.f32 %v861, %v865
    %868 = vrot.lane.b32.xlu0 %v862, 96
    %v869 = vpop.permute.xlu0 %868
    %v871 = vmax.f32 %v867, %v869
    %873 = vrot.lane.b32.xlu0 %v871, 17
    %v874 = vpop.permute.xlu0 %873
    %876 = vst.msk [vmem:[#allocation2] sm:$0xff] %vm28, %v874
    %v877 = vld [vmem:[#allocation2] sm:$0xff]
    %879 = vrot.lane.b32.xlu0 %v877, 127
    %v880 = vpop.permute.xlu0 %879
    %v882 = vmax.f32 %v877, %v880
    %883 = vrot.lane.b32.xlu0 %v877, 126
    %v884 = vpop.permute.xlu0 %883
    %v886 = vmax.f32 %v882, %v884
    %v888 = vsel %vm40, %v886, 0
    %890 = vmatpush.msra.mxu0 0.0
    %891 = vmatpush.msra.mxu0 0.0
    %892 = vmatpush.msra.mxu0 0.0
    %893 = vmatpush.msra.mxu0 0.0
    %894 = vmatpush.msra.mxu0 0.0
    %895 = vmatpush.msra.mxu0 0.0
    %896 = vmatpush.msra.mxu0 0.0
    %897 = vmatpush.msra.mxu0 0.0
    %898 = vmatpush.msra.mxu0 0.0
    %899 = vmatpush.msra.mxu0 0.0
    %900 = vmatpush.msra.mxu0 0.0
    %901 = vmatpush.msra.mxu0 0.0
    %902 = vmatpush.msra.mxu0 0.0
    %903 = vmatpush.msra.mxu0 0.0
    %v904 = vand.u32 %v46, 4294901760
    %905 = vmatpush.msra.mxu0 %v904
    %v906 = vand.u32 %v12, 4294901760
    %907 = vmatpush.msra.mxu0 %v906
    %v908 = vand.u32 %v888, 4294901760
    %v909 = vsub.f32 %v888, %v908
    %v910 = vand.u32 %v909, 4294901760
    %v911 = vsub.f32 %v909, %v910
    %v912 = vand.u32 %v911, 4294901760
    %913 = vmatmul.f32.gmra.mxu0 %v912
    %v914 = vpop.f32.mrf.mxu0
    %v915 = vadd.f32 0.0, %v914
    %916 = vdwg.mxu0
    %917 = vmatpush.msra.mxu0 0.0
    %918 = vmatpush.msra.mxu0 0.0
    %919 = vmatpush.msra.mxu0 0.0
    %920 = vmatpush.msra.mxu0 0.0
    %921 = vmatpush.msra.mxu0 0.0
    %922 = vmatpush.msra.mxu0 0.0
    %923 = vmatpush.msra.mxu0 0.0
    %924 = vmatpush.msra.mxu0 0.0
    %925 = vmatpush.msra.mxu0 0.0
    %926 = vmatpush.msra.mxu0 0.0
    %927 = vmatpush.msra.mxu0 0.0
    %928 = vmatpush.msra.mxu0 0.0
    %929 = vmatpush.msra.mxu0 0.0
    %930 = vmatpush.msra.mxu0 0.0
    %v931 = vand.u32 %v46, 4294901760
    %v932 = vsub.f32 %v46, %v931
    %v933 = vand.u32 %v932, 4294901760
    %v934 = vsub.f32 %v932, %v933
    %v935 = vand.u32 %v934, 4294901760
    %936 = vmatpush.msra.mxu0 %v935
    %v937 = vand.u32 %v12, 4294901760
    %v938 = vsub.f32 %v12, %v937
    %v939 = vand.u32 %v938, 4294901760
    %v940 = vsub.f32 %v938, %v939
    %v941 = vand.u32 %v940, 4294901760
    %942 = vmatpush.msra.mxu0 %v941
    %v943 = vand.u32 %v888, 4294901760
    %944 = vmatmul.f32.gmra.mxu0 %v943
    %v945 = vpop.f32.mrf.mxu0
    %v946 = vadd.f32 %v915, %v945
    %947 = vdwg.mxu0
    %948 = vmatpush.msra.mxu0 0.0
    %949 = vmatpush.msra.mxu0 0.0
    %950 = vmatpush.msra.mxu0 0.0
    %951 = vmatpush.msra.mxu0 0.0
    %952 = vmatpush.msra.mxu0 0.0
    %953 = vmatpush.msra.mxu0 0.0
    %954 = vmatpush.msra.mxu0 0.0
    %955 = vmatpush.msra.mxu0 0.0
    %956 = vmatpush.msra.mxu0 0.0
    %957 = vmatpush.msra.mxu0 0.0
    %958 = vmatpush.msra.mxu0 0.0
    %959 = vmatpush.msra.mxu0 0.0
    %960 = vmatpush.msra.mxu0 0.0
    %961 = vmatpush.msra.mxu0 0.0
    %v962 = vand.u32 %v46, 4294901760
    %v963 = vsub.f32 %v46, %v962
    %964 = vmatpush.msra.mxu0 %v963
    %v965 = vand.u32 %v12, 4294901760
    %v966 = vsub.f32 %v12, %v965
    %967 = vmatpush.msra.mxu0 %v966
    %v968 = vand.u32 %v888, 4294901760
    %v969 = vsub.f32 %v888, %v968
    %970 = vmatmul.f32.gmra.mxu0 %v969
    %v971 = vpop.f32.mrf.mxu0
    %v972 = vadd.f32 %v946, %v971
    %973 = vdwg.mxu0
    %974 = vmatpush.msra.mxu0 0.0
    %975 = vmatpush.msra.mxu0 0.0
    %976 = vmatpush.msra.mxu0 0.0
    %977 = vmatpush.msra.mxu0 0.0
    %978 = vmatpush.msra.mxu0 0.0
    %979 = vmatpush.msra.mxu0 0.0
    %980 = vmatpush.msra.mxu0 0.0
    %981 = vmatpush.msra.mxu0 0.0
    %982 = vmatpush.msra.mxu0 0.0
    %983 = vmatpush.msra.mxu0 0.0
    %984 = vmatpush.msra.mxu0 0.0
    %985 = vmatpush.msra.mxu0 0.0
    %986 = vmatpush.msra.mxu0 0.0
    %987 = vmatpush.msra.mxu0 0.0
    %v988 = vand.u32 %v46, 4294901760
    %989 = vmatpush.msra.mxu0 %v988
    %v990 = vand.u32 %v12, 4294901760
    %991 = vmatpush.msra.mxu0 %v990
    %v992 = vand.u32 %v888, 4294901760
    %v993 = vsub.f32 %v888, %v992
    %v994 = vand.u32 %v993, 4294901760
    %995 = vmatmul.f32.gmra.mxu0 %v994
    %v996 = vpop.f32.mrf.mxu0
    %v997 = vadd.f32 %v972, %v996
    %998 = vdwg.mxu0
    %999 = vmatpush.msra.mxu0 0.0
    %1000 = vmatpush.msra.mxu0 0.0
    %1001 = vmatpush.msra.mxu0 0.0
    %1002 = vmatpush.msra.mxu0 0.0
    %1003 = vmatpush.msra.mxu0 0.0
    %1004 = vmatpush.msra.mxu0 0.0
    %1005 = vmatpush.msra.mxu0 0.0
    %1006 = vmatpush.msra.mxu0 0.0
    %1007 = vmatpush.msra.mxu0 0.0
    %1008 = vmatpush.msra.mxu0 0.0
    %1009 = vmatpush.msra.mxu0 0.0
    %1010 = vmatpush.msra.mxu0 0.0
    %1011 = vmatpush.msra.mxu0 0.0
    %1012 = vmatpush.msra.mxu0 0.0
    %v1013 = vand.u32 %v46, 4294901760
    %v1014 = vsub.f32 %v46, %v1013
    %v1015 = vand.u32 %v1014, 4294901760
    %1016 = vmatpush.msra.mxu0 %v1015
    %v1017 = vand.u32 %v12, 4294901760
    %v1018 = vsub.f32 %v12, %v1017
    %v1019 = vand.u32 %v1018, 4294901760
    %1020 = vmatpush.msra.mxu0 %v1019
    %v1021 = vand.u32 %v888, 4294901760
    %1022 = vmatmul.f32.gmra.mxu0 %v1021
    %v1023 = vpop.f32.mrf.mxu0
    %v1024 = vadd.f32 %v997, %v1023
    %1025 = vdwg.mxu0
    %1026 = vmatpush.msra.mxu0 0.0
    %1027 = vmatpush.msra.mxu0 0.0
    %1028 = vmatpush.msra.mxu0 0.0
    %1029 = vmatpush.msra.mxu0 0.0
    %1030 = vmatpush.msra.mxu0 0.0
    %1031 = vmatpush.msra.mxu0 0.0
    %1032 = vmatpush.msra.mxu0 0.0
    %1033 = vmatpush.msra.mxu0 0.0
    %1034 = vmatpush.msra.mxu0 0.0
    %1035 = vmatpush.msra.mxu0 0.0
    %1036 = vmatpush.msra.mxu0 0.0
    %1037 = vmatpush.msra.mxu0 0.0
    %1038 = vmatpush.msra.mxu0 0.0
    %1039 = vmatpush.msra.mxu0 0.0
    %v1040 = vand.u32 %v46, 4294901760
    %1041 = vmatpush.msra.mxu0 %v1040
    %v1042 = vand.u32 %v12, 4294901760
    %1043 = vmatpush.msra.mxu0 %v1042
    %v1044 = vand.u32 %v888, 4294901760
    %1045 = vmatmul.f32.gmra.mxu0 %v1044
    %v1046 = vpop.f32.mrf.mxu0
    %v1047 = vadd.f32 %v1024, %v1046
    %1048 = vdwg.mxu0
    %v1050 = vrot.slane %v1047, 1
    %v1051 = vrot.slane %v1047, 2
    %v1052 = vrot.slane %v1047, 3
    %v1053 = vrot.slane %v1047, 4
    %v1054 = vrot.slane %v1047, 5
    %v1055 = vrot.slane %v1047, 6
    %v1056 = vrot.slane %v1047, 7
    %1064 = vst.msk [vmem:[#allocation3 + $0x4] sm:$0x1] %vm222, %v1047
    %1065 = vst.msk [vmem:[#allocation3 + $0xc] sm:$0x1] %vm222, %v1050
    %1066 = vst.msk [vmem:[#allocation3 + $0x14] sm:$0x1] %vm222, %v1051
    %1067 = vst.msk [vmem:[#allocation3 + $0x1c] sm:$0x1] %vm222, %v1052
    %1068 = vst.msk [vmem:[#allocation3 + $0x24] sm:$0x1] %vm222, %v1053
    %1069 = vst.msk [vmem:[#allocation3 + $0x2c] sm:$0x1] %vm222, %v1054
    %1070 = vst.msk [vmem:[#allocation3 + $0x34] sm:$0x1] %vm222, %v1055
    %1071 = vst.msk [vmem:[#allocation3 + $0x3c] sm:$0x1] %vm222, %v1056
    %v1072 = vld [vmem:[%s0 + $0x8] sm:$0xff]
    %1074 = vrot.lane.b32.xlu0 %v1072, 112
    %v1075 = vpop.permute.xlu0 %1074
    %v1077 = vmax.f32 %v1072, %v1075
    %1078 = vrot.lane.b32.xlu0 %v1072, 96
    %v1079 = vpop.permute.xlu0 %1078
    %v1081 = vmax.f32 %v1077, %v1079
    %1083 = vrot.lane.b32.xlu0 %v1081, 113
    %v1084 = vpop.permute.xlu0 %1083
    %1086 = vst.msk [vmem:[#allocation2] sm:$0xff] %vm28, %v1084
    %v1087 = vld [vmem:[#allocation2] sm:$0xff]
    %1089 = vrot.lane.b32.xlu0 %v1087, 127
    %v1090 = vpop.permute.xlu0 %1089
    %v1092 = vmax.f32 %v1087, %v1090
    %1093 = vrot.lane.b32.xlu0 %v1087, 126
    %v1094 = vpop.permute.xlu0 %1093
    %v1096 = vmax.f32 %v1092, %v1094
    %v1098 = vsel %vm40, %v1096, 0
    %1100 = vmatpush.msra.mxu0 0.0
    %1101 = vmatpush.msra.mxu0 0.0
    %1102 = vmatpush.msra.mxu0 0.0
    %1103 = vmatpush.msra.mxu0 0.0
    %1104 = vmatpush.msra.mxu0 0.0
    %1105 = vmatpush.msra.mxu0 0.0
    %1106 = vmatpush.msra.mxu0 0.0
    %1107 = vmatpush.msra.mxu0 0.0
    %1108 = vmatpush.msra.mxu0 0.0
    %1109 = vmatpush.msra.mxu0 0.0
    %1110 = vmatpush.msra.mxu0 0.0
    %1111 = vmatpush.msra.mxu0 0.0
    %1112 = vmatpush.msra.mxu0 0.0
    %1113 = vmatpush.msra.mxu0 0.0
    %v1114 = vand.u32 %v46, 4294901760
    %1115 = vmatpush.msra.mxu0 %v1114
    %v1116 = vand.u32 %v12, 4294901760
    %1117 = vmatpush.msra.mxu0 %v1116
    %v1118 = vand.u32 %v1098, 4294901760
    %v1119 = vsub.f32 %v1098, %v1118
    %v1120 = vand.u32 %v1119, 4294901760
    %v1121 = vsub.f32 %v1119, %v1120
    %v1122 = vand.u32 %v1121, 4294901760
    %1123 = vmatmul.f32.gmra.mxu0 %v1122
    %v1124 = vpop.f32.mrf.mxu0
    %v1125 = vadd.f32 0.0, %v1124
    %1126 = vdwg.mxu0
    %1127 = vmatpush.msra.mxu0 0.0
    %1128 = vmatpush.msra.mxu0 0.0
    %1129 = vmatpush.msra.mxu0 0.0
    %1130 = vmatpush.msra.mxu0 0.0
    %1131 = vmatpush.msra.mxu0 0.0
    %1132 = vmatpush.msra.mxu0 0.0
    %1133 = vmatpush.msra.mxu0 0.0
    %1134 = vmatpush.msra.mxu0 0.0
    %1135 = vmatpush.msra.mxu0 0.0
    %1136 = vmatpush.msra.mxu0 0.0
    %1137 = vmatpush.msra.mxu0 0.0
    %1138 = vmatpush.msra.mxu0 0.0
    %1139 = vmatpush.msra.mxu0 0.0
    %1140 = vmatpush.msra.mxu0 0.0
    %v1141 = vand.u32 %v46, 4294901760
    %v1142 = vsub.f32 %v46, %v1141
    %v1143 = vand.u32 %v1142, 4294901760
    %v1144 = vsub.f32 %v1142, %v1143
    %v1145 = vand.u32 %v1144, 4294901760
    %1146 = vmatpush.msra.mxu0 %v1145
    %v1147 = vand.u32 %v12, 4294901760
    %v1148 = vsub.f32 %v12, %v1147
    %v1149 = vand.u32 %v1148, 4294901760
    %v1150 = vsub.f32 %v1148, %v1149
    %v1151 = vand.u32 %v1150, 4294901760
    %1152 = vmatpush.msra.mxu0 %v1151
    %v1153 = vand.u32 %v1098, 4294901760
    %1154 = vmatmul.f32.gmra.mxu0 %v1153
    %v1155 = vpop.f32.mrf.mxu0
    %v1156 = vadd.f32 %v1125, %v1155
    %1157 = vdwg.mxu0
    %1158 = vmatpush.msra.mxu0 0.0
    %1159 = vmatpush.msra.mxu0 0.0
    %1160 = vmatpush.msra.mxu0 0.0
    %1161 = vmatpush.msra.mxu0 0.0
    %1162 = vmatpush.msra.mxu0 0.0
    %1163 = vmatpush.msra.mxu0 0.0
    %1164 = vmatpush.msra.mxu0 0.0
    %1165 = vmatpush.msra.mxu0 0.0
    %1166 = vmatpush.msra.mxu0 0.0
    %1167 = vmatpush.msra.mxu0 0.0
    %1168 = vmatpush.msra.mxu0 0.0
    %1169 = vmatpush.msra.mxu0 0.0
    %1170 = vmatpush.msra.mxu0 0.0
    %1171 = vmatpush.msra.mxu0 0.0
    %v1172 = vand.u32 %v46, 4294901760
    %v1173 = vsub.f32 %v46, %v1172
    %1174 = vmatpush.msra.mxu0 %v1173
    %v1175 = vand.u32 %v12, 4294901760
    %v1176 = vsub.f32 %v12, %v1175
    %1177 = vmatpush.msra.mxu0 %v1176
    %v1178 = vand.u32 %v1098, 4294901760
    %v1179 = vsub.f32 %v1098, %v1178
    %1180 = vmatmul.f32.gmra.mxu0 %v1179
    %v1181 = vpop.f32.mrf.mxu0
    %v1182 = vadd.f32 %v1156, %v1181
    %1183 = vdwg.mxu0
    %1184 = vmatpush.msra.mxu0 0.0
    %1185 = vmatpush.msra.mxu0 0.0
    %1186 = vmatpush.msra.mxu0 0.0
    %1187 = vmatpush.msra.mxu0 0.0
    %1188 = vmatpush.msra.mxu0 0.0
    %1189 = vmatpush.msra.mxu0 0.0
    %1190 = vmatpush.msra.mxu0 0.0
    %1191 = vmatpush.msra.mxu0 0.0
    %1192 = vmatpush.msra.mxu0 0.0
    %1193 = vmatpush.msra.mxu0 0.0
    %1194 = vmatpush.msra.mxu0 0.0
    %1195 = vmatpush.msra.mxu0 0.0
    %1196 = vmatpush.msra.mxu0 0.0
    %1197 = vmatpush.msra.mxu0 0.0
    %v1198 = vand.u32 %v46, 4294901760
    %1199 = vmatpush.msra.mxu0 %v1198
    %v1200 = vand.u32 %v12, 4294901760
    %1201 = vmatpush.msra.mxu0 %v1200
    %v1202 = vand.u32 %v1098, 4294901760
    %v1203 = vsub.f32 %v1098, %v1202
    %v1204 = vand.u32 %v1203, 4294901760
    %1205 = vmatmul.f32.gmra.mxu0 %v1204
    %v1206 = vpop.f32.mrf.mxu0
    %v1207 = vadd.f32 %v1182, %v1206
    %1208 = vdwg.mxu0
    %1209 = vmatpush.msra.mxu0 0.0
    %1210 = vmatpush.msra.mxu0 0.0
    %1211 = vmatpush.msra.mxu0 0.0
    %1212 = vmatpush.msra.mxu0 0.0
    %1213 = vmatpush.msra.mxu0 0.0
    %1214 = vmatpush.msra.mxu0 0.0
    %1215 = vmatpush.msra.mxu0 0.0
    %1216 = vmatpush.msra.mxu0 0.0
    %1217 = vmatpush.msra.mxu0 0.0
    %1218 = vmatpush.msra.mxu0 0.0
    %1219 = vmatpush.msra.mxu0 0.0
    %1220 = vmatpush.msra.mxu0 0.0
    %1221 = vmatpush.msra.mxu0 0.0
    %1222 = vmatpush.msra.mxu0 0.0
    %v1223 = vand.u32 %v46, 4294901760
    %v1224 = vsub.f32 %v46, %v1223
    %v1225 = vand.u32 %v1224, 4294901760
    %1226 = vmatpush.msra.mxu0 %v1225
    %v1227 = vand.u32 %v12, 4294901760
    %v1228 = vsub.f32 %v12, %v1227
    %v1229 = vand.u32 %v1228, 4294901760
    %1230 = vmatpush.msra.mxu0 %v1229
    %v1231 = vand.u32 %v1098, 4294901760
    %1232 = vmatmul.f32.gmra.mxu0 %v1231
    %v1233 = vpop.f32.mrf.mxu0
    %v1234 = vadd.f32 %v1207, %v1233
    %1235 = vdwg.mxu0
    %1236 = vmatpush.msra.mxu0 0.0
    %1237 = vmatpush.msra.mxu0 0.0
    %1238 = vmatpush.msra.mxu0 0.0
    %1239 = vmatpush.msra.mxu0 0.0
    %1240 = vmatpush.msra.mxu0 0.0
    %1241 = vmatpush.msra.mxu0 0.0
    %1242 = vmatpush.msra.mxu0 0.0
    %1243 = vmatpush.msra.mxu0 0.0
    %1244 = vmatpush.msra.mxu0 0.0
    %1245 = vmatpush.msra.mxu0 0.0
    %1246 = vmatpush.msra.mxu0 0.0
    %1247 = vmatpush.msra.mxu0 0.0
    %1248 = vmatpush.msra.mxu0 0.0
    %1249 = vmatpush.msra.mxu0 0.0
    %v1250 = vand.u32 %v46, 4294901760
    %1251 = vmatpush.msra.mxu0 %v1250
    %v1252 = vand.u32 %v12, 4294901760
    %1253 = vmatpush.msra.mxu0 %v1252
    %v1254 = vand.u32 %v1098, 4294901760
    %1255 = vmatmul.f32.gmra.mxu0 %v1254
    %v1256 = vpop.f32.mrf.mxu0
    %v1257 = vadd.f32 %v1234, %v1256
    %1258 = vdwg.mxu0
    %v1260 = vrot.slane %v1257, 1
    %v1261 = vrot.slane %v1257, 2
    %v1262 = vrot.slane %v1257, 3
    %v1263 = vrot.slane %v1257, 4
    %v1264 = vrot.slane %v1257, 5
    %v1265 = vrot.slane %v1257, 6
    %v1266 = vrot.slane %v1257, 7
    %1274 = vst.msk [vmem:[#allocation3 + $0x5] sm:$0x1] %vm222, %v1257
    %1275 = vst.msk [vmem:[#allocation3 + $0xd] sm:$0x1] %vm222, %v1260
    %1276 = vst.msk [vmem:[#allocation3 + $0x15] sm:$0x1] %vm222, %v1261
    %1277 = vst.msk [vmem:[#allocation3 + $0x1d] sm:$0x1] %vm222, %v1262
    %1278 = vst.msk [vmem:[#allocation3 + $0x25] sm:$0x1] %vm222, %v1263
    %1279 = vst.msk [vmem:[#allocation3 + $0x2d] sm:$0x1] %vm222, %v1264
    %1280 = vst.msk [vmem:[#allocation3 + $0x35] sm:$0x1] %vm222, %v1265
    %1281 = vst.msk [vmem:[#allocation3 + $0x3d] sm:$0x1] %vm222, %v1266
    %v1282 = vld [vmem:[%s0 + $0x8] sm:$0xff]
    %1284 = vrot.lane.b32.xlu0 %v1282, 112
    %v1285 = vpop.permute.xlu0 %1284
    %v1287 = vmax.f32 %v1282, %v1285
    %1288 = vrot.lane.b32.xlu0 %v1282, 96
    %v1289 = vpop.permute.xlu0 %1288
    %v1291 = vmax.f32 %v1287, %v1289
    %1293 = vrot.lane.b32.xlu0 %v1291, 81
    %v1294 = vpop.permute.xlu0 %1293
    %1296 = vst.msk [vmem:[#allocation2] sm:$0xff] %vm28, %v1294
    %v1297 = vld [vmem:[#allocation2] sm:$0xff]
    %1299 = vrot.lane.b32.xlu0 %v1297, 127
    %v1300 = vpop.permute.xlu0 %1299
    %v1302 = vmax.f32 %v1297, %v1300
    %1303 = vrot.lane.b32.xlu0 %v1297, 126
    %v1304 = vpop.permute.xlu0 %1303
    %v1306 = vmax.f32 %v1302, %v1304
    %v1308 = vsel %vm40, %v1306, 0
    %1310 = vmatpush.msra.mxu0 0.0
    %1311 = vmatpush.msra.mxu0 0.0
    %1312 = vmatpush.msra.mxu0 0.0
    %1313 = vmatpush.msra.mxu0 0.0
    %1314 = vmatpush.msra.mxu0 0.0
    %1315 = vmatpush.msra.mxu0 0.0
    %1316 = vmatpush.msra.mxu0 0.0
    %1317 = vmatpush.msra.mxu0 0.0
    %1318 = vmatpush.msra.mxu0 0.0
    %1319 = vmatpush.msra.mxu0 0.0
    %1320 = vmatpush.msra.mxu0 0.0
    %1321 = vmatpush.msra.mxu0 0.0
    %1322 = vmatpush.msra.mxu0 0.0
    %1323 = vmatpush.msra.mxu0 0.0
    %v1324 = vand.u32 %v46, 4294901760
    %1325 = vmatpush.msra.mxu0 %v1324
    %v1326 = vand.u32 %v12, 4294901760
    %1327 = vmatpush.msra.mxu0 %v1326
    %v1328 = vand.u32 %v1308, 4294901760
    %v1329 = vsub.f32 %v1308, %v1328
    %v1330 = vand.u32 %v1329, 4294901760
    %v1331 = vsub.f32 %v1329, %v1330
    %v1332 = vand.u32 %v1331, 4294901760
    %1333 = vmatmul.f32.gmra.mxu0 %v1332
    %v1334 = vpop.f32.mrf.mxu0
    %v1335 = vadd.f32 0.0, %v1334
    %1336 = vdwg.mxu0
    %1337 = vmatpush.msra.mxu0 0.0
    %1338 = vmatpush.msra.mxu0 0.0
    %1339 = vmatpush.msra.mxu0 0.0
    %1340 = vmatpush.msra.mxu0 0.0
    %1341 = vmatpush.msra.mxu0 0.0
    %1342 = vmatpush.msra.mxu0 0.0
    %1343 = vmatpush.msra.mxu0 0.0
    %1344 = vmatpush.msra.mxu0 0.0
    %1345 = vmatpush.msra.mxu0 0.0
    %1346 = vmatpush.msra.mxu0 0.0
    %1347 = vmatpush.msra.mxu0 0.0
    %1348 = vmatpush.msra.mxu0 0.0
    %1349 = vmatpush.msra.mxu0 0.0
    %1350 = vmatpush.msra.mxu0 0.0
    %v1351 = vand.u32 %v46, 4294901760
    %v1352 = vsub.f32 %v46, %v1351
    %v1353 = vand.u32 %v1352, 4294901760
    %v1354 = vsub.f32 %v1352, %v1353
    %v1355 = vand.u32 %v1354, 4294901760
    %1356 = vmatpush.msra.mxu0 %v1355
    %v1357 = vand.u32 %v12, 4294901760
    %v1358 = vsub.f32 %v12, %v1357
    %v1359 = vand.u32 %v1358, 4294901760
    %v1360 = vsub.f32 %v1358, %v1359
    %v1361 = vand.u32 %v1360, 4294901760
    %1362 = vmatpush.msra.mxu0 %v1361
    %v1363 = vand.u32 %v1308, 4294901760
    %1364 = vmatmul.f32.gmra.mxu0 %v1363
    %v1365 = vpop.f32.mrf.mxu0
    %v1366 = vadd.f32 %v1335, %v1365
    %1367 = vdwg.mxu0
    %1368 = vmatpush.msra.mxu0 0.0
    %1369 = vmatpush.msra.mxu0 0.0
    %1370 = vmatpush.msra.mxu0 0.0
    %1371 = vmatpush.msra.mxu0 0.0
    %1372 = vmatpush.msra.mxu0 0.0
    %1373 = vmatpush.msra.mxu0 0.0
    %1374 = vmatpush.msra.mxu0 0.0
    %1375 = vmatpush.msra.mxu0 0.0
    %1376 = vmatpush.msra.mxu0 0.0
    %1377 = vmatpush.msra.mxu0 0.0
    %1378 = vmatpush.msra.mxu0 0.0
    %1379 = vmatpush.msra.mxu0 0.0
    %1380 = vmatpush.msra.mxu0 0.0
    %1381 = vmatpush.msra.mxu0 0.0
    %v1382 = vand.u32 %v46, 4294901760
    %v1383 = vsub.f32 %v46, %v1382
    %1384 = vmatpush.msra.mxu0 %v1383
    %v1385 = vand.u32 %v12, 4294901760
    %v1386 = vsub.f32 %v12, %v1385
    %1387 = vmatpush.msra.mxu0 %v1386
    %v1388 = vand.u32 %v1308, 4294901760
    %v1389 = vsub.f32 %v1308, %v1388
    %1390 = vmatmul.f32.gmra.mxu0 %v1389
    %v1391 = vpop.f32.mrf.mxu0
    %v1392 = vadd.f32 %v1366, %v1391
    %1393 = vdwg.mxu0
    %1394 = vmatpush.msra.mxu0 0.0
    %1395 = vmatpush.msra.mxu0 0.0
    %1396 = vmatpush.msra.mxu0 0.0
    %1397 = vmatpush.msra.mxu0 0.0
    %1398 = vmatpush.msra.mxu0 0.0
    %1399 = vmatpush.msra.mxu0 0.0
    %1400 = vmatpush.msra.mxu0 0.0
    %1401 = vmatpush.msra.mxu0 0.0
    %1402 = vmatpush.msra.mxu0 0.0
    %1403 = vmatpush.msra.mxu0 0.0
    %1404 = vmatpush.msra.mxu0 0.0
    %1405 = vmatpush.msra.mxu0 0.0
    %1406 = vmatpush.msra.mxu0 0.0
    %1407 = vmatpush.msra.mxu0 0.0
    %v1408 = vand.u32 %v46, 4294901760
    %1409 = vmatpush.msra.mxu0 %v1408
    %v1410 = vand.u32 %v12, 4294901760
    %1411 = vmatpush.msra.mxu0 %v1410
    %v1412 = vand.u32 %v1308, 4294901760
    %v1413 = vsub.f32 %v1308, %v1412
    %v1414 = vand.u32 %v1413, 4294901760
    %1415 = vmatmul.f32.gmra.mxu0 %v1414
    %v1416 = vpop.f32.mrf.mxu0
    %v1417 = vadd.f32 %v1392, %v1416
    %1418 = vdwg.mxu0
    %1419 = vmatpush.msra.mxu0 0.0
    %1420 = vmatpush.msra.mxu0 0.0
    %1421 = vmatpush.msra.mxu0 0.0
    %1422 = vmatpush.msra.mxu0 0.0
    %1423 = vmatpush.msra.mxu0 0.0
    %1424 = vmatpush.msra.mxu0 0.0
    %1425 = vmatpush.msra.mxu0 0.0
    %1426 = vmatpush.msra.mxu0 0.0
    %1427 = vmatpush.msra.mxu0 0.0
    %1428 = vmatpush.msra.mxu0 0.0
    %1429 = vmatpush.msra.mxu0 0.0
    %1430 = vmatpush.msra.mxu0 0.0
    %1431 = vmatpush.msra.mxu0 0.0
    %1432 = vmatpush.msra.mxu0 0.0
    %v1433 = vand.u32 %v46, 4294901760
    %v1434 = vsub.f32 %v46, %v1433
    %v1435 = vand.u32 %v1434, 4294901760
    %1436 = vmatpush.msra.mxu0 %v1435
    %v1437 = vand.u32 %v12, 4294901760
    %v1438 = vsub.f32 %v12, %v1437
    %v1439 = vand.u32 %v1438, 4294901760
    %1440 = vmatpush.msra.mxu0 %v1439
    %v1441 = vand.u32 %v1308, 4294901760
    %1442 = vmatmul.f32.gmra.mxu0 %v1441
    %v1443 = vpop.f32.mrf.mxu0
    %v1444 = vadd.f32 %v1417, %v1443
    %1445 = vdwg.mxu0
    %1446 = vmatpush.msra.mxu0 0.0
    %1447 = vmatpush.msra.mxu0 0.0
    %1448 = vmatpush.msra.mxu0 0.0
    %1449 = vmatpush.msra.mxu0 0.0
    %1450 = vmatpush.msra.mxu0 0.0
    %1451 = vmatpush.msra.mxu0 0.0
    %1452 = vmatpush.msra.mxu0 0.0
    %1453 = vmatpush.msra.mxu0 0.0
    %1454 = vmatpush.msra.mxu0 0.0
    %1455 = vmatpush.msra.mxu0 0.0
    %1456 = vmatpush.msra.mxu0 0.0
    %1457 = vmatpush.msra.mxu0 0.0
    %1458 = vmatpush.msra.mxu0 0.0
    %1459 = vmatpush.msra.mxu0 0.0
    %v1460 = vand.u32 %v46, 4294901760
    %1461 = vmatpush.msra.mxu0 %v1460
    %v1462 = vand.u32 %v12, 4294901760
    %1463 = vmatpush.msra.mxu0 %v1462
    %v1464 = vand.u32 %v1308, 4294901760
    %1465 = vmatmul.f32.gmra.mxu0 %v1464
    %v1466 = vpop.f32.mrf.mxu0
    %v1467 = vadd.f32 %v1444, %v1466
    %1468 = vdwg.mxu0
    %v1470 = vrot.slane %v1467, 1
    %v1471 = vrot.slane %v1467, 2
    %v1472 = vrot.slane %v1467, 3
    %v1473 = vrot.slane %v1467, 4
    %v1474 = vrot.slane %v1467, 5
    %v1475 = vrot.slane %v1467, 6
    %v1476 = vrot.slane %v1467, 7
    %1484 = vst.msk [vmem:[#allocation3 + $0x6] sm:$0x1] %vm222, %v1467
    %1485 = vst.msk [vmem:[#allocation3 + $0xe] sm:$0x1] %vm222, %v1470
    %1486 = vst.msk [vmem:[#allocation3 + $0x16] sm:$0x1] %vm222, %v1471
    %1487 = vst.msk [vmem:[#allocation3 + $0x1e] sm:$0x1] %vm222, %v1472
    %1488 = vst.msk [vmem:[#allocation3 + $0x26] sm:$0x1] %vm222, %v1473
    %1489 = vst.msk [vmem:[#allocation3 + $0x2e] sm:$0x1] %vm222, %v1474
    %1490 = vst.msk [vmem:[#allocation3 + $0x36] sm:$0x1] %vm222, %v1475
    %1491 = vst.msk [vmem:[#allocation3 + $0x3e] sm:$0x1] %vm222, %v1476
    %v1492 = vld [vmem:[%s0 + $0x8] sm:$0xff]
    %1494 = vrot.lane.b32.xlu0 %v1492, 112
    %v1495 = vpop.permute.xlu0 %1494
    %v1497 = vmax.f32 %v1492, %v1495
    %1498 = vrot.lane.b32.xlu0 %v1492, 96
    %v1499 = vpop.permute.xlu0 %1498
    %v1501 = vmax.f32 %v1497, %v1499
    %1503 = vrot.lane.b32.xlu0 %v1501, 49
    %v1504 = vpop.permute.xlu0 %1503
    %1506 = vst.msk [vmem:[#allocation2] sm:$0xff] %vm28, %v1504
    %v1507 = vld [vmem:[#allocation2] sm:$0xff]
    %1509 = vrot.lane.b32.xlu0 %v1507, 127
    %v1510 = vpop.permute.xlu0 %1509
    %v1512 = vmax.f32 %v1507, %v1510
    %1513 = vrot.lane.b32.xlu0 %v1507, 126
    %v1514 = vpop.permute.xlu0 %1513
    %v1516 = vmax.f32 %v1512, %v1514
    %v1518 = vsel %vm40, %v1516, 0
    %1520 = vmatpush.msra.mxu0 0.0
    %1521 = vmatpush.msra.mxu0 0.0
    %1522 = vmatpush.msra.mxu0 0.0
    %1523 = vmatpush.msra.mxu0 0.0
    %1524 = vmatpush.msra.mxu0 0.0
    %1525 = vmatpush.msra.mxu0 0.0
    %1526 = vmatpush.msra.mxu0 0.0
    %1527 = vmatpush.msra.mxu0 0.0
    %1528 = vmatpush.msra.mxu0 0.0
    %1529 = vmatpush.msra.mxu0 0.0
    %1530 = vmatpush.msra.mxu0 0.0
    %1531 = vmatpush.msra.mxu0 0.0
    %1532 = vmatpush.msra.mxu0 0.0
    %1533 = vmatpush.msra.mxu0 0.0
    %v1534 = vand.u32 %v46, 4294901760
    %1535 = vmatpush.msra.mxu0 %v1534
    %v1536 = vand.u32 %v12, 4294901760
    %1537 = vmatpush.msra.mxu0 %v1536
    %v1538 = vand.u32 %v1518, 4294901760
    %v1539 = vsub.f32 %v1518, %v1538
    %v1540 = vand.u32 %v1539, 4294901760
    %v1541 = vsub.f32 %v1539, %v1540
    %v1542 = vand.u32 %v1541, 4294901760
    %1543 = vmatmul.f32.gmra.mxu0 %v1542
    %v1544 = vpop.f32.mrf.mxu0
    %v1545 = vadd.f32 0.0, %v1544
    %1546 = vdwg.mxu0
    %1547 = vmatpush.msra.mxu0 0.0
    %1548 = vmatpush.msra.mxu0 0.0
    %1549 = vmatpush.msra.mxu0 0.0
    %1550 = vmatpush.msra.mxu0 0.0
    %1551 = vmatpush.msra.mxu0 0.0
    %1552 = vmatpush.msra.mxu0 0.0
    %1553 = vmatpush.msra.mxu0 0.0
    %1554 = vmatpush.msra.mxu0 0.0
    %1555 = vmatpush.msra.mxu0 0.0
    %1556 = vmatpush.msra.mxu0 0.0
    %1557 = vmatpush.msra.mxu0 0.0
    %1558 = vmatpush.msra.mxu0 0.0
    %1559 = vmatpush.msra.mxu0 0.0
    %1560 = vmatpush.msra.mxu0 0.0
    %v1561 = vand.u32 %v46, 4294901760
    %v1562 = vsub.f32 %v46, %v1561
    %v1563 = vand.u32 %v1562, 4294901760
    %v1564 = vsub.f32 %v1562, %v1563
    %v1565 = vand.u32 %v1564, 4294901760
    %1566 = vmatpush.msra.mxu0 %v1565
    %v1567 = vand.u32 %v12, 4294901760
    %v1568 = vsub.f32 %v12, %v1567
    %v1569 = vand.u32 %v1568, 4294901760
    %v1570 = vsub.f32 %v1568, %v1569
    %v1571 = vand.u32 %v1570, 4294901760
    %1572 = vmatpush.msra.mxu0 %v1571
    %v1573 = vand.u32 %v1518, 4294901760
    %1574 = vmatmul.f32.gmra.mxu0 %v1573
    %v1575 = vpop.f32.mrf.mxu0
    %v1576 = vadd.f32 %v1545, %v1575
    %1577 = vdwg.mxu0
    %1578 = vmatpush.msra.mxu0 0.0
    %1579 = vmatpush.msra.mxu0 0.0
    %1580 = vmatpush.msra.mxu0 0.0
    %1581 = vmatpush.msra.mxu0 0.0
    %1582 = vmatpush.msra.mxu0 0.0
    %1583 = vmatpush.msra.mxu0 0.0
    %1584 = vmatpush.msra.mxu0 0.0
    %1585 = vmatpush.msra.mxu0 0.0
    %1586 = vmatpush.msra.mxu0 0.0
    %1587 = vmatpush.msra.mxu0 0.0
    %1588 = vmatpush.msra.mxu0 0.0
    %1589 = vmatpush.msra.mxu0 0.0
    %1590 = vmatpush.msra.mxu0 0.0
    %1591 = vmatpush.msra.mxu0 0.0
    %v1592 = vand.u32 %v46, 4294901760
    %v1593 = vsub.f32 %v46, %v1592
    %1594 = vmatpush.msra.mxu0 %v1593
    %v1595 = vand.u32 %v12, 4294901760
    %v1596 = vsub.f32 %v12, %v1595
    %1597 = vmatpush.msra.mxu0 %v1596
    %v1598 = vand.u32 %v1518, 4294901760
    %v1599 = vsub.f32 %v1518, %v1598
    %1600 = vmatmul.f32.gmra.mxu0 %v1599
    %v1601 = vpop.f32.mrf.mxu0
    %v1602 = vadd.f32 %v1576, %v1601
    %1603 = vdwg.mxu0
    %1604 = vmatpush.msra.mxu0 0.0
    %1605 = vmatpush.msra.mxu0 0.0
    %1606 = vmatpush.msra.mxu0 0.0
    %1607 = vmatpush.msra.mxu0 0.0
    %1608 = vmatpush.msra.mxu0 0.0
    %1609 = vmatpush.msra.mxu0 0.0
    %1610 = vmatpush.msra.mxu0 0.0
    %1611 = vmatpush.msra.mxu0 0.0
    %1612 = vmatpush.msra.mxu0 0.0
    %1613 = vmatpush.msra.mxu0 0.0
    %1614 = vmatpush.msra.mxu0 0.0
    %1615 = vmatpush.msra.mxu0 0.0
    %1616 = vmatpush.msra.mxu0 0.0
    %1617 = vmatpush.msra.mxu0 0.0
    %v1618 = vand.u32 %v46, 4294901760
    %1619 = vmatpush.msra.mxu0 %v1618
    %v1620 = vand.u32 %v12, 4294901760
    %1621 = vmatpush.msra.mxu0 %v1620
    %v1622 = vand.u32 %v1518, 4294901760
    %v1623 = vsub.f32 %v1518, %v1622
    %v1624 = vand.u32 %v1623, 4294901760
    %1625 = vmatmul.f32.gmra.mxu0 %v1624
    %v1626 = vpop.f32.mrf.mxu0
    %v1627 = vadd.f32 %v1602, %v1626
    %1628 = vdwg.mxu0
    %1629 = vmatpush.msra.mxu0 0.0
    %1630 = vmatpush.msra.mxu0 0.0
    %1631 = vmatpush.msra.mxu0 0.0
    %1632 = vmatpush.msra.mxu0 0.0
    %1633 = vmatpush.msra.mxu0 0.0
    %1634 = vmatpush.msra.mxu0 0.0
    %1635 = vmatpush.msra.mxu0 0.0
    %1636 = vmatpush.msra.mxu0 0.0
    %1637 = vmatpush.msra.mxu0 0.0
    %1638 = vmatpush.msra.mxu0 0.0
    %1639 = vmatpush.msra.mxu0 0.0
    %1640 = vmatpush.msra.mxu0 0.0
    %1641 = vmatpush.msra.mxu0 0.0
    %1642 = vmatpush.msra.mxu0 0.0
    %v1643 = vand.u32 %v46, 4294901760
    %v1644 = vsub.f32 %v46, %v1643
    %v1645 = vand.u32 %v1644, 4294901760
    %1646 = vmatpush.msra.mxu0 %v1645
    %v1647 = vand.u32 %v12, 4294901760
    %v1648 = vsub.f32 %v12, %v1647
    %v1649 = vand.u32 %v1648, 4294901760
    %1650 = vmatpush.msra.mxu0 %v1649
    %v1651 = vand.u32 %v1518, 4294901760
    %1652 = vmatmul.f32.gmra.mxu0 %v1651
    %v1653 = vpop.f32.mrf.mxu0
    %v1654 = vadd.f32 %v1627, %v1653
    %1655 = vdwg.mxu0
    %1656 = vmatpush.msra.mxu0 0.0
    %1657 = vmatpush.msra.mxu0 0.0
    %1658 = vmatpush.msra.mxu0 0.0
    %1659 = vmatpush.msra.mxu0 0.0
    %1660 = vmatpush.msra.mxu0 0.0
    %1661 = vmatpush.msra.mxu0 0.0
    %1662 = vmatpush.msra.mxu0 0.0
    %1663 = vmatpush.msra.mxu0 0.0
    %1664 = vmatpush.msra.mxu0 0.0
    %1665 = vmatpush.msra.mxu0 0.0
    %1666 = vmatpush.msra.mxu0 0.0
    %1667 = vmatpush.msra.mxu0 0.0
    %1668 = vmatpush.msra.mxu0 0.0
    %1669 = vmatpush.msra.mxu0 0.0
    %v1670 = vand.u32 %v46, 4294901760
    %1671 = vmatpush.msra.mxu0 %v1670
    %v1672 = vand.u32 %v12, 4294901760
    %1673 = vmatpush.msra.mxu0 %v1672
    %v1674 = vand.u32 %v1518, 4294901760
    %1675 = vmatmul.f32.gmra.mxu0 %v1674
    %v1676 = vpop.f32.mrf.mxu0
    %v1677 = vadd.f32 %v1654, %v1676
    %1678 = vdwg.mxu0
    %v1680 = vrot.slane %v1677, 1
    %v1681 = vrot.slane %v1677, 2
    %v1682 = vrot.slane %v1677, 3
    %v1683 = vrot.slane %v1677, 4
    %v1684 = vrot.slane %v1677, 5
    %v1685 = vrot.slane %v1677, 6
    %v1686 = vrot.slane %v1677, 7
    %1694 = vst.msk [vmem:[#allocation3 + $0x7] sm:$0x1] %vm222, %v1677
    %1695 = vst.msk [vmem:[#allocation3 + $0xf] sm:$0x1] %vm222, %v1680
    %1696 = vst.msk [vmem:[#allocation3 + $0x17] sm:$0x1] %vm222, %v1681
    %1697 = vst.msk [vmem:[#allocation3 + $0x1f] sm:$0x1] %vm222, %v1682
    %1698 = vst.msk [vmem:[#allocation3 + $0x27] sm:$0x1] %vm222, %v1683
    %1699 = vst.msk [vmem:[#allocation3 + $0x2f] sm:$0x1] %vm222, %v1684
    %1700 = vst.msk [vmem:[#allocation3 + $0x37] sm:$0x1] %vm222, %v1685
    %1701 = vst.msk [vmem:[#allocation3 + $0x3f] sm:$0x1] %vm222, %v1686
    // Predicated region
    $region10: #{tpu_custom_call.1} parent=1 // pred_check
      _
    $region11: #{tpu_custom_call.1} parent=1 // pred_check_branch
      %1703 = sbr.rel (0) target = $region13
    $region12: #{tpu_custom_call.1} parent=1 // pred_region
      %1705 = vsyncadd [#allocation4], 0
      %s1706 = sshll.u32 [#allocation3], 4
      %s1707 = int_to_ptr.vmem [resolvable:$true] %s1706
      %s1708 = sshll.u32 %s2, 4
      %s1709 = int_to_ptr.hbm [resolvable:$true] %s1708
      %1714 = dma.vmem_to_hbm [thread:$0]  %s1707, 1024, %s1709, [#allocation4], 128, 128, 8
    $region13: #{tpu_custom_call.1} parent=1 // pred_fallthru
      _
    // Predicated region
    $region14: #{tpu_custom_call.1} parent=1 // pred_check
      _
    $region15: #{tpu_custom_call.1} parent=1 // pred_check_branch
      %1716 = sbr.rel (0) target = $region17
    $region16: #{tpu_custom_call.1} parent=1 // pred_region
      %1718 = dma.done [#allocation4], 1024
    $region17: #{tpu_custom_call.1} parent=1 // pred_fallthru
      _
    %1719 = vsyncpa [#allocation4], 1

</llo_original>
